<compile_context>
chip_gen: v5e
topology: v5e:2x2
jax: 0.10.0
libtpu: 0.0.40
codegen_flags: <defaults>
</compile_context>

<pallas_src>
import math
import functools

import numpy as np
import jax
import jax.numpy as jnp
from jax.experimental import pallas as pl
from jax.experimental.pallas import tpu as pltpu


def _round_up(x, m):
    return ((x + m - 1) // m) * m


def _cdiv(a, b):
    return (a + b - 1) // b


def _pick_vmem_limit():
    # ~100 MiB on v5e/v6e (128 MiB physical), ~48 MiB on v7x (64 MiB physical).
    try:
        cap = getattr(pltpu.get_tpu_info(), "vmem_capacity_bytes", None)
        if cap:
            return int(min(max(cap - 16 * 1024 * 1024, 32 * 1024 * 1024),
                           100 * 1024 * 1024))
    except Exception:
        pass
    return 48 * 1024 * 1024


# --------------------------------------------------------------------------- #
# Fused forward kernel (runs on a (batch, query-tile, hw-chunk) grid).        #
# --------------------------------------------------------------------------- #
def _msda_kernel(chunk_lvl_ref,                       # SMEM (n_chunks,) int32
                 q_ref, ref_ref, id_ref,              # (1,Qt,E) (1,Qt,nl*rd) (1,Qt,E)
                 v_ref, keep_ref, cx_ref, cy_ref,     # (1,C,E) (1,1,C) (1,C) (1,C)
                 wv_ref, bv_ref, wq_ref, bq_ref, wo_ref, bo_ref,
                 out_ref,                             # (1,Qt,E)
                 locx_sc, locy_sc, attn_sc, acc_sc, *,
                 spatial_shapes, num_heads, num_points, ref_dim):
    f32, bf16 = jnp.float32, jnp.bfloat16
    nh, npts = num_heads, num_points
    nl = len(spatial_shapes)
    nlp = nl * npts
    noff = nh * npts
    q_tile, embed = q_ref.shape[1], q_ref.shape[2]
    d = embed // nh
    c = pl.program_id(2)

    # ----- once per (batch, query-tile): query projection + softmax + coords ----
    @pl.when(c == 0)
    def _init():
        qp = jnp.dot(q_ref[0].astype(bf16), wq_ref[...],
                     preferred_element_type=f32) + bq_ref[...]       # (Qt, 3*nh*nlp)
        off = qp[:, : 2 * nh * nlp]        # offsets, (level, xy, head, point) order
        logit = qp[:, 2 * nh * nlp:]       # attention logits, (head, level, point)
        ref_q = ref_ref[0]                                           # (Qt, nl*rd)

        # per-level pixel-space sampling coordinates (grid_sample, align_corners=False)
        for l, (h_l, w_l) in enumerate(spatial_shapes):
            base = l * 2 * noff
            ox = off[:, base: base + noff]                           # (Qt, nh*npts)
            oy = off[:, base + noff: base + 2 * noff]
            if ref_dim == 2:
                rx = ref_q[:, l * 2: l * 2 + 1]
                ry = ref_q[:, l * 2 + 1: l * 2 + 2]
                ix = rx * float(w_l) - 0.5 + ox
                iy = ry * float(h_l) - 0.5 + oy
            else:
                rx = ref_q[:, l * 4: l * 4 + 1]
                ry = ref_q[:, l * 4 + 1: l * 4 + 2]
                rw = ref_q[:, l * 4 + 2: l * 4 + 3]
                rh = ref_q[:, l * 4 + 3: l * 4 + 4]
                ix = (rx + ox * rw * (0.5 / npts)) * float(w_l) - 0.5
                iy = (ry + oy * rh * (0.5 / npts)) * float(h_l) - 0.5
            locx_sc[l] = ix
            locy_sc[l] = iy

        # per-head softmax over (levels * points); normalizer on the EUP
        attn_cols = [[] for _ in range(nl)]
        for h in range(nh):
            lg = logit[:, h * nlp:(h + 1) * nlp]
            lg = lg - jnp.max(lg, axis=-1, keepdims=True)
            ex = jnp.exp(lg)
            a = ex * pl.reciprocal(jnp.sum(ex, axis=-1, keepdims=True),
                                   approx=True)                      # (Qt, nlp)
            for l in range(nl):
                attn_cols[l].append(a[:, l * npts:(l + 1) * npts])
        for l in range(nl):
            attn_sc[l] = jnp.concatenate(attn_cols[l], axis=-1)      # (Qt, nh*npts)

        acc_sc[...] = jnp.zeros_like(acc_sc)

    # ----- every chunk: select level, project value chunk, tent-sample ---------
    lvl = chunk_lvl_ref[c]
    lx, ly, at = locx_sc[0], locy_sc[0], attn_sc[0]
    for l in range(1, nl):
        sel = lvl == l
        lx = jnp.where(sel, locx_sc[l], lx)
        ly = jnp.where(sel, locy_sc[l], ly)
        at = jnp.where(sel, attn_sc[l], at)

    cx = cx_ref[...]                                                 # (1, C)
    cy = cy_ref[...]
    keep = keep_ref[0]                                               # (1, C)

    # chunk-wise value projection, shared across heads (bf16 MXU, f32 acc)
    vproj = (jnp.dot(v_ref[0], wv_ref[...], preferred_element_type=f32)
             + bv_ref[...]).astype(jnp.bfloat16)                     # (C, E)

    for h in range(nh):
        comb = None
        for p in range(npts):
            i = h * npts + p
            # tent weights == bilinear corner weights; out-of-range samples -> 0
            wx = jnp.maximum(1.0 - jnp.abs(lx[:, i:i + 1] - cx), 0.0)
            wy = jnp.maximum(1.0 - jnp.abs(ly[:, i:i + 1] - cy), 0.0)
            t = (wx * wy) * at[:, i:i + 1]                           # (Qt, C)
            comb = t if comb is None else comb + t
        comb = comb * keep                                           # mask pad / kpm
        acc_sc[:, h * d:(h + 1) * d] += jnp.dot(
            comb.astype(jnp.bfloat16), vproj[:, h * d:(h + 1) * d],
            preferred_element_type=f32)

    # ----- last chunk: single fused output projection + residual ---------------
    @pl.when(c == pl.num_programs(2) - 1)
    def _finalize():
        out = jnp.dot(acc_sc[...].astype(jnp.bfloat16), wo_ref[...],
                      preferred_element_type=f32)                    # (Qt, E)
        out_ref[0] = (out + bo_ref[...] + id_ref[0]).astype(out_ref.dtype)


# --------------------------------------------------------------------------- #
# Module wrapper (parameter init + padding / grid glue).                      #
# --------------------------------------------------------------------------- #
class CustomMSDeformableAttention:
    def __init__(self, embed_dims=32, num_heads=4, num_levels=2, num_points=2,
                 batch_first=False, q_tile=64, hw_chunk=512, key=None):
        if embed_dims % num_heads != 0:
            raise ValueError("embed_dims must be divisible by num_heads")
        self.embed_dims = embed_dims
        self.num_heads = num_heads
        self.num_levels = num_levels
        self.num_points = num_points
        self.batch_first = batch_first
        self.q_tile = max(8, _round_up(q_tile, 8))
        self.hw_chunk = max(128, _round_up(hw_chunk, 128))
        if key is None:
            key = jax.random.PRNGKey(0)
        k_vp, k_op = jax.random.split(key)

        e = embed_dims
        nh, nl, np_ = num_heads, num_levels, num_points

        # sampling_offsets: weight = 0, bias = directional grid init (PyTorch layout)
        self.w_sampling = jnp.zeros((e, nh * nl * np_ * 2), jnp.float32)
        thetas = jnp.arange(nh, dtype=jnp.float32) * (2.0 * math.pi / nh)
        grid_init = jnp.stack([jnp.cos(thetas), jnp.sin(thetas)], -1)      # (H, 2)
        grid_init = grid_init / jnp.max(jnp.abs(grid_init), axis=-1, keepdims=True)
        grid_init = jnp.tile(grid_init[:, None, None, :], (1, nl, np_, 1)) # (H,L,P,2)
        scale = jnp.arange(1, np_ + 1, dtype=jnp.float32).reshape(1, 1, np_, 1)
        self.b_sampling = (grid_init * scale).reshape(-1)

        # attention_weights: weight = 0, bias = 0
        self.w_attn = jnp.zeros((e, nh * nl * np_), jnp.float32)
        self.b_attn = jnp.zeros((nh * nl * np_,), jnp.float32)

        # kernel-side fused query projection: offsets permuted to (l, xy, h, p)
        w_s5 = self.w_sampling.reshape(e, nh, nl, np_, 2)
        b_s4 = self.b_sampling.reshape(nh, nl, np_, 2)
        w_s_perm = jnp.transpose(w_s5, (0, 2, 4, 1, 3)).reshape(e, nl * 2 * nh * np_)
        b_s_perm = jnp.transpose(b_s4, (1, 3, 0, 2)).reshape(-1)
        self.w_qcat = jnp.concatenate([w_s_perm, self.w_attn], axis=1)
        self.b_qcat = jnp.concatenate([b_s_perm, self.b_attn], axis=0)

        # value_proj / output_proj: xavier-uniform weights, zero bias
        bound = math.sqrt(6.0 / (e + e))
        self.w_value = jax.random.uniform(k_vp, (e, e), jnp.float32, -bound, bound)
        self.b_value = jnp.zeros((e,), jnp.float32)
        self.w_out = jax.random.uniform(k_op, (e, e), jnp.float32, -bound, bound)
        self.b_out = jnp.zeros((e,), jnp.float32)

    def __call__(self, query, key=None, value=None, identity=None,
                 query_pos=None, key_padding_mask=None,
                 reference_points=None, spatial_shapes=None, **kwargs):
        if value is None:
            value = query
        if identity is None:
            identity = query
        q = query if query_pos is None else query + query_pos
        if not self.batch_first:
            qb = jnp.transpose(q, (1, 0, 2))             # (bs, Q, E)
            vb = jnp.transpose(value, (1, 0, 2))         # (bs, NV, E)
            idb = jnp.transpose(identity, (1, 0, 2))     # (bs, Q, E)
        else:
            qb, vb, idb = q, value, identity

        bs, num_query, e = qb.shape
        num_value = vb.shape[1]
        nh, nl, npts = self.num_heads, self.num_levels, self.num_points
        spatial_shapes = tuple((int(h), int(w)) for (h, w) in spatial_shapes)
        assert len(spatial_shapes) == nl
        assert sum(h * w for h, w in spatial_shapes) == num_value

        ref_dim = reference_points.shape[-1]
        if ref_dim not in (2, 4):
            raise ValueError("reference_points last dim must be 2 or 4")
        ref2d = reference_points.reshape(bs, num_query, nl * ref_dim).astype(jnp.float32)

        if key_padding_mask is not None:
            keep = 1.0 - key_padding_mask.astype(jnp.float32)        # (bs, NV)
        else:
            keep = jnp.ones((bs, num_value), jnp.float32)

        # ---- query-axis padding / tiling ----
        q_tile = min(self.q_tile, _round_up(num_query, 8))
        q_pad = _round_up(num_query, q_tile)

        def pad_q(x):
            return jnp.pad(x, ((0, 0), (0, q_pad - num_query), (0, 0)))

        qb_p = pad_q(qb.astype(jnp.float32))
        idb_p = pad_q(idb.astype(jnp.float32))
        ref_p = pad_q(ref2d)

        # ---- value axis: lane-aligned, zero-padded per-level chunks ----
        max_hw = max(h * w for h, w in spatial_shapes)
        hw_chunk = max(128, min(self.hw_chunk, _round_up(max_hw, 128)))
        segs_v, segs_k, segs_cx, segs_cy, chunk_level = [], [], [], [], []
        start = 0
        for l, (h_l, w_l) in enumerate(spatial_shapes):
            hw = h_l * w_l
            n_chunks = _cdiv(hw, hw_chunk)
            hw_p = n_chunks * hw_chunk
            segs_v.append(jnp.pad(vb[:, start:start + hw].astype(jnp.float32),
                                  ((0, 0), (0, hw_p - hw), (0, 0))))
            segs_k.append(jnp.pad(keep[:, start:start + hw],
                                  ((0, 0), (0, hw_p - hw))))
            cxl = np.tile(np.arange(w_l, dtype=np.float32), h_l)
            cyl = np.repeat(np.arange(h_l, dtype=np.float32), w_l)
            segs_cx.append(np.pad(cxl, (0, hw_p - hw)))
            segs_cy.append(np.pad(cyl, (0, hw_p - hw)))
            chunk_level += [l] * n_chunks
            start += hw
        v_pad = jnp.concatenate(segs_v, axis=1).astype(jnp.bfloat16)   # (bs, NVp, E)
        keep_pad = jnp.concatenate(segs_k, axis=1)[:, None, :]         # (bs, 1, NVp)
        cell_x = jnp.asarray(np.concatenate(segs_cx))[None, :]         # (1, NVp)
        cell_y = jnp.asarray(np.concatenate(segs_cy))[None, :]
        chunk_level = jnp.asarray(np.asarray(chunk_level, np.int32))
        n_chunks_total = int(chunk_level.shape[0])

        nlp = nl * npts
        qcat = 3 * nh * nlp

        kernel = functools.partial(
            _msda_kernel,
            spatial_shapes=spatial_shapes,
            num_heads=nh, num_points=npts, ref_dim=ref_dim)

        grid = (bs, q_pad // q_tile, n_chunks_total)
        grid_spec = pltpu.PrefetchScalarGridSpec(
            num_scalar_prefetch=1,
            grid=grid,
            in_specs=[
                pl.BlockSpec((1, q_tile, e), lambda b, qi, c, lv: (b, qi, 0)),
                pl.BlockSpec((1, q_tile, nl * ref_dim),
                             lambda b, qi, c, lv: (b, qi, 0)),
                pl.BlockSpec((1, q_tile, e), lambda b, qi, c, lv: (b, qi, 0)),
                pl.BlockSpec((1, hw_chunk, e), lambda b, qi, c, lv: (b, c, 0)),
                pl.BlockSpec((1, 1, hw_chunk), lambda b, qi, c, lv: (b, 0, c)),
                pl.BlockSpec((1, hw_chunk), lambda b, qi, c, lv: (0, c)),
                pl.BlockSpec((1, hw_chunk), lambda b, qi, c, lv: (0, c)),
                pl.BlockSpec((e, e), lambda b, qi, c, lv: (0, 0)),
                pl.BlockSpec((1, e), lambda b, qi, c, lv: (0, 0)),
                pl.BlockSpec((e, qcat), lambda b, qi, c, lv: (0, 0)),
                pl.BlockSpec((1, qcat), lambda b, qi, c, lv: (0, 0)),
                pl.BlockSpec((e, e), lambda b, qi, c, lv: (0, 0)),
                pl.BlockSpec((1, e), lambda b, qi, c, lv: (0, 0)),
            ],
            out_specs=pl.BlockSpec((1, q_tile, e), lambda b, qi, c, lv: (b, qi, 0)),
            scratch_shapes=[
                pltpu.VMEM((nl, q_tile, nh * npts), jnp.float32),   # pixel x coords
                pltpu.VMEM((nl, q_tile, nh * npts), jnp.float32),   # pixel y coords
                pltpu.VMEM((nl, q_tile, nh * npts), jnp.float32),   # attention wgts
                pltpu.VMEM((q_tile, e), jnp.float32),               # head-concat acc
            ],
        )

        out = pl.pallas_call(
            kernel,
            out_shape=jax.ShapeDtypeStruct((bs, q_pad, e), jnp.float32),
            grid_spec=grid_spec,
            compiler_params=pltpu.CompilerParams(
                dimension_semantics=("parallel", "parallel", "arbitrary"),
                vmem_limit_bytes=_pick_vmem_limit()),
        )(chunk_level,
          qb_p, ref_p, idb_p, v_pad, keep_pad, cell_x, cell_y,
          self.w_value.astype(jnp.bfloat16), self.b_value.reshape(1, e),
          self.w_qcat.astype(jnp.bfloat16), self.b_qcat.reshape(1, qcat),
          self.w_out.astype(jnp.bfloat16), self.b_out.reshape(1, e))

        out = out[:, :num_query]
        if not self.batch_first:
            out = jnp.transpose(out, (1, 0, 2))          # (Q, bs, E)
        # nn.Dropout is identity in eval/inference mode; residual added in-kernel.
        return out


# --------------------------------------------------------------------------- #
# Pure-JAX (XLA) reference mirroring the PyTorch forward, for verification.   #
# --------------------------------------------------------------------------- #
def _reference_forward(mod, query, value, identity, query_pos,
                       reference_points, spatial_shapes):
    q = query + query_pos
    qb = jnp.transpose(q, (1, 0, 2))
    vb = jnp.transpose(value, (1, 0, 2))
    idb = jnp.transpose(identity, (1, 0, 2))
    bs, nq, e = qb.shape
    nh, nl, npts = mod.num_heads, mod.num_levels, mod.num_points
    d = e // nh

    v = vb @ mod.w_value + mod.b_value
    so = (qb @ mod.w_sampling + mod.b_sampling).reshape(bs, nq, nh, nl, npts, 2)
    aw = (qb @ mod.w_attn + mod.b_attn).reshape(bs, nq, nh, nl * npts)
    aw = jax.nn.softmax(aw, axis=-1).reshape(bs, nq, nh, nl, npts)
    norm = jnp.array([[w, h] for (h, w) in spatial_shapes], jnp.float32)
    loc = (reference_points[:, :, None, :, None, :]
           + so / norm[None, None, None, :, None, :])

    v4 = v.reshape(bs, -1, nh, d)
    out = jnp.zeros((bs, nq, nh, d), jnp.float32)
    bidx = jnp.arange(bs)[:, None, None]
    hidx = jnp.arange(nh)[None, None, :]
    start = 0
    for l, (hl, wl) in enumerate(spatial_shapes):
        v_l = v4[:, start:start + hl * wl].reshape(bs, hl, wl, nh, d)
        for p in range(npts):
            ix = loc[:, :, :, l, p, 0] * wl - 0.5
            iy = loc[:, :, :, l, p, 1] * hl - 0.5
            x0 = jnp.floor(ix)
            y0 = jnp.floor(iy)
            tx = ix - x0
            ty = iy - y0
            x0i = x0.astype(jnp.int32)
            y0i = y0.astype(jnp.int32)

            def corner(yi, xi, wgt):
                valid = ((xi >= 0) & (xi < wl) & (yi >= 0) & (yi < hl))
                yc = jnp.clip(yi, 0, hl - 1)
                xc = jnp.clip(xi, 0, wl - 1)
                g = v_l[bidx, yc, xc, hidx]
                return g * (wgt * valid.astype(jnp.float32))[..., None]

            samp = (corner(y0i, x0i, (1 - ty) * (1 - tx))
                    + corner(y0i, x0i + 1, (1 - ty) * tx)
                    + corner(y0i + 1, x0i, ty * (1 - tx))
                    + corner(y0i + 1, x0i + 1, ty * tx))
            out = out + samp * aw[:, :, :, l, p][..., None]
        start += hl * wl
    out = out.reshape(bs, nq, e) @ mod.w_out + mod.b_out + idb
    return jnp.transpose(out, (1, 0, 2))


if __name__ == "__main__":
    master = jax.random.PRNGKey(0)
    k_q, k_v, k_pos, k_ref, k_par = jax.random.split(master, 5)

    embed_dims, num_heads, num_levels, num_points = 32, 4, 2, 2
    bs, num_query = 2, 8
    spatial_shapes = ((8, 8), (4, 4))                   # (H, W) per level, static
    num_value = sum(h * w for h, w in spatial_shapes)   # 80

    query = jax.random.normal(k_q, (num_query, bs, embed_dims), jnp.float32)
    value = jax.random.normal(k_v, (num_value, bs, embed_dims), jnp.float32)
    query_pos = jax.random.normal(k_pos, (num_query, bs, embed_dims), jnp.float32)
    reference_points = jax.random.uniform(
        k_ref, (bs, num_query, num_levels, 2), jnp.float32)

    attn = CustomMSDeformableAttention(embed_dims=embed_dims,
                                       num_heads=num_heads,
                                       num_levels=num_levels,
                                       num_points=num_points,
                                       batch_first=False,
                                       key=k_par)

    out = attn(query, value=value, query_pos=query_pos,
               reference_points=reference_points,
               spatial_shapes=spatial_shapes)
    out = jax.block_until_ready(out)
    assert out.shape == (num_query, bs, embed_dims)
    assert bool(jnp.all(jnp.isfinite(out)))

    ref = _reference_forward(attn, query, value, query, query_pos,
                             reference_points, spatial_shapes)
    max_err = float(jnp.max(jnp.abs(out - ref)))
    assert max_err < 0.1, f"kernel/reference mismatch: {max_err}"

    print("KERNEL_OK")
</pallas_src>

<mosaic_0001>
module attributes {stable_mosaic.version = 11 : i64} {
  func.func @_msda_kernel(%arg0: i32, %arg1: i32, %arg2: i32, %arg3: memref<2xi32, #tpu.memory_space<smem>>, %arg4: memref<1x8x32xf32, #tpu.memory_space<vmem>>, %arg5: memref<1x8x4xf32, #tpu.memory_space<vmem>>, %arg6: memref<1x8x32xf32, #tpu.memory_space<vmem>>, %arg7: memref<1x128x32xbf16, #tpu.memory_space<vmem>>, %arg8: memref<1x1x128xf32, #tpu.memory_space<vmem>>, %arg9: memref<1x128xf32, #tpu.memory_space<vmem>>, %arg10: memref<1x128xf32, #tpu.memory_space<vmem>>, %arg11: memref<32x32xbf16, #tpu.memory_space<vmem>>, %arg12: memref<1x32xf32, #tpu.memory_space<vmem>>, %arg13: memref<32x48xbf16, #tpu.memory_space<vmem>>, %arg14: memref<1x48xf32, #tpu.memory_space<vmem>>, %arg15: memref<32x32xbf16, #tpu.memory_space<vmem>>, %arg16: memref<1x32xf32, #tpu.memory_space<vmem>>, %arg17: memref<1x8x32xf32, #tpu.memory_space<vmem>>, %arg18: memref<2x8x8xf32, #tpu.memory_space<vmem>>, %arg19: memref<2x8x8xf32, #tpu.memory_space<vmem>>, %arg20: memref<2x8x8xf32, #tpu.memory_space<vmem>>, %arg21: memref<8x32xf32, #tpu.memory_space<vmem>>) attributes {dimension_semantics = [#tpu.dimension_semantics<parallel>, #tpu.dimension_semantics<parallel>, #tpu.dimension_semantics<arbitrary>], iteration_bounds = array<i64: 2, 1, 2>, scalar_prefetch = 1 : i64, scratch_operands = 4 : i64, tpu.core_type = #tpu.core_type<tc>, window_params = [{transform_indices = @transform_0, window_bounds = array<i64: 1, 8, 32>}, {transform_indices = @transform_1, window_bounds = array<i64: 1, 8, 4>}, {transform_indices = @transform_2, window_bounds = array<i64: 1, 8, 32>}, {transform_indices = @transform_3, window_bounds = array<i64: 1, 128, 32>}, {transform_indices = @transform_4, window_bounds = array<i64: 1, 1, 128>}, {transform_indices = @transform_5, window_bounds = array<i64: 1, 128>}, {transform_indices = @transform_6, window_bounds = array<i64: 1, 128>}, {pipeline_mode = #tpu.pipeline_mode<synchronous>, transform_indices = @transform_7, window_bounds = array<i64: 32, 32>}, {pipeline_mode = #tpu.pipeline_mode<synchronous>, transform_indices = @transform_8, window_bounds = array<i64: 1, 32>}, {pipeline_mode = #tpu.pipeline_mode<synchronous>, transform_indices = @transform_9, window_bounds = array<i64: 32, 48>}, {pipeline_mode = #tpu.pipeline_mode<synchronous>, transform_indices = @transform_10, window_bounds = array<i64: 1, 48>}, {pipeline_mode = #tpu.pipeline_mode<synchronous>, transform_indices = @transform_11, window_bounds = array<i64: 32, 32>}, {pipeline_mode = #tpu.pipeline_mode<synchronous>, transform_indices = @transform_12, window_bounds = array<i64: 1, 32>}, {transform_indices = @transform_13, window_bounds = array<i64: 1, 8, 32>}]} {
    %c0_i32 = arith.constant 0 : i32
    %0 = arith.cmpi eq, %arg2, %c0_i32 : i32
    %1 = arith.extui %0 : i1 to i32
    %c0_i32_0 = arith.constant 0 : i32
    %2 = arith.cmpi ne, %1, %c0_i32_0 : i32
    scf.if %2 {
      %c0_82 = arith.constant 0 : index
      %c0_83 = arith.constant 0 : index
      %c0_84 = arith.constant 0 : index
      %248 = vector.load %arg4[%c0_82, %c0_83, %c0_84] : memref<1x8x32xf32, #tpu.memory_space<vmem>>, vector<1x8x32xf32>
      %249 = vector.shape_cast %248 : vector<1x8x32xf32> to vector<8x32xf32>
      %250 = arith.truncf %249 : vector<8x32xf32> to vector<8x32xbf16>
      %c0_85 = arith.constant 0 : index
      %c0_86 = arith.constant 0 : index
      %251 = vector.load %arg13[%c0_85, %c0_86] : memref<32x48xbf16, #tpu.memory_space<vmem>>, vector<32x48xbf16>
      %cst_87 = arith.constant dense<0.000000e+00> : vector<8x48xf32>
      %252 = tpu.matmul %250, %251, %cst_87 {dimension_numbers = #tpu.dot_dimension_numbers<[1], [0], [0], [1], [0, 0, 1, 1], [], []>} : vector<8x32xbf16>, vector<32x48xbf16>, vector<8x48xf32> -> vector<8x48xf32>
      %c0_88 = arith.constant 0 : index
      %c0_89 = arith.constant 0 : index
      %253 = vector.load %arg14[%c0_88, %c0_89] : memref<1x48xf32, #tpu.memory_space<vmem>>, vector<1x48xf32>
      %254 = vector.broadcast %253 : vector<1x48xf32> to vector<8x48xf32>
      %255 = arith.addf %252, %254 : vector<8x48xf32>
      %256 = vector.extract_strided_slice %255 {offsets = [0, 0], sizes = [8, 32], strides = [1, 1]} : vector<8x48xf32> to vector<8x32xf32>
      %257 = vector.extract_strided_slice %255 {offsets = [0, 32], sizes = [8, 16], strides = [1, 1]} : vector<8x48xf32> to vector<8x16xf32>
      %c0_90 = arith.constant 0 : index
      %c0_91 = arith.constant 0 : index
      %c0_92 = arith.constant 0 : index
      %258 = vector.load %arg5[%c0_90, %c0_91, %c0_92] : memref<1x8x4xf32, #tpu.memory_space<vmem>>, vector<1x8x4xf32>
      %259 = vector.shape_cast %258 : vector<1x8x4xf32> to vector<8x4xf32>
      %260 = vector.extract_strided_slice %256 {offsets = [0, 0], sizes = [8, 8], strides = [1, 1]} : vector<8x32xf32> to vector<8x8xf32>
      %261 = vector.extract_strided_slice %256 {offsets = [0, 8], sizes = [8, 8], strides = [1, 1]} : vector<8x32xf32> to vector<8x8xf32>
      %262 = vector.extract_strided_slice %259 {offsets = [0, 0], sizes = [8, 1], strides = [1, 1]} : vector<8x4xf32> to vector<8x1xf32>
      %263 = vector.extract_strided_slice %259 {offsets = [0, 1], sizes = [8, 1], strides = [1, 1]} : vector<8x4xf32> to vector<8x1xf32>
      %cst_93 = arith.constant 8.000000e+00 : f32
      %264 = vector.broadcast %cst_93 : f32 to vector<8x1xf32>
      %265 = arith.mulf %262, %264 : vector<8x1xf32>
      %cst_94 = arith.constant 5.000000e-01 : f32
      %266 = vector.broadcast %cst_94 : f32 to vector<8x1xf32>
      %267 = arith.subf %265, %266 : vector<8x1xf32>
      %268 = vector.broadcast %267 : vector<8x1xf32> to vector<8x8xf32>
      %269 = arith.addf %268, %260 : vector<8x8xf32>
      %cst_95 = arith.constant 8.000000e+00 : f32
      %270 = vector.broadcast %cst_95 : f32 to vector<8x1xf32>
      %271 = arith.mulf %263, %270 : vector<8x1xf32>
      %cst_96 = arith.constant 5.000000e-01 : f32
      %272 = vector.broadcast %cst_96 : f32 to vector<8x1xf32>
      %273 = arith.subf %271, %272 : vector<8x1xf32>
      %274 = vector.broadcast %273 : vector<8x1xf32> to vector<8x8xf32>
      %275 = arith.addf %274, %261 : vector<8x8xf32>
      %c0_97 = arith.constant 0 : index
      %c0_98 = arith.constant 0 : index
      %c0_99 = arith.constant 0 : index
      %276 = vector.load %arg18[%c0_97, %c0_98, %c0_99] : memref<2x8x8xf32, #tpu.memory_space<vmem>>, vector<1x8x8xf32>
      %277 = vector.shape_cast %276 : vector<1x8x8xf32> to vector<8x8xf32>
      %278 = vector.shape_cast %269 : vector<8x8xf32> to vector<1x8x8xf32>
      tpu.vector_store %arg18[%c0_97, %c0_98, %c0_99], %278 {strides = array<i32>} : memref<2x8x8xf32, #tpu.memory_space<vmem>>, vector<1x8x8xf32>,
      %c0_100 = arith.constant 0 : index
      %c0_101 = arith.constant 0 : index
      %c0_102 = arith.constant 0 : index
      %279 = vector.load %arg19[%c0_100, %c0_101, %c0_102] : memref<2x8x8xf32, #tpu.memory_space<vmem>>, vector<1x8x8xf32>
      %280 = vector.shape_cast %279 : vector<1x8x8xf32> to vector<8x8xf32>
      %281 = vector.shape_cast %275 : vector<8x8xf32> to vector<1x8x8xf32>
      tpu.vector_store %arg19[%c0_100, %c0_101, %c0_102], %281 {strides = array<i32>} : memref<2x8x8xf32, #tpu.memory_space<vmem>>, vector<1x8x8xf32>,
      %282 = vector.extract_strided_slice %256 {offsets = [0, 16], sizes = [8, 8], strides = [1, 1]} : vector<8x32xf32> to vector<8x8xf32>
      %283 = vector.extract_strided_slice %256 {offsets = [0, 24], sizes = [8, 8], strides = [1, 1]} : vector<8x32xf32> to vector<8x8xf32>
      %284 = vector.extract_strided_slice %259 {offsets = [0, 2], sizes = [8, 1], strides = [1, 1]} : vector<8x4xf32> to vector<8x1xf32>
      %285 = vector.extract_strided_slice %259 {offsets = [0, 3], sizes = [8, 1], strides = [1, 1]} : vector<8x4xf32> to vector<8x1xf32>
      %cst_103 = arith.constant 4.000000e+00 : f32
      %286 = vector.broadcast %cst_103 : f32 to vector<8x1xf32>
      %287 = arith.mulf %284, %286 : vector<8x1xf32>
      %cst_104 = arith.constant 5.000000e-01 : f32
      %288 = vector.broadcast %cst_104 : f32 to vector<8x1xf32>
      %289 = arith.subf %287, %288 : vector<8x1xf32>
      %290 = vector.broadcast %289 : vector<8x1xf32> to vector<8x8xf32>
      %291 = arith.addf %290, %282 : vector<8x8xf32>
      %cst_105 = arith.constant 4.000000e+00 : f32
      %292 = vector.broadcast %cst_105 : f32 to vector<8x1xf32>
      %293 = arith.mulf %285, %292 : vector<8x1xf32>
      %cst_106 = arith.constant 5.000000e-01 : f32
      %294 = vector.broadcast %cst_106 : f32 to vector<8x1xf32>
      %295 = arith.subf %293, %294 : vector<8x1xf32>
      %296 = vector.broadcast %295 : vector<8x1xf32> to vector<8x8xf32>
      %297 = arith.addf %296, %283 : vector<8x8xf32>
      %c1_107 = arith.constant 1 : index
      %c0_108 = arith.constant 0 : index
      %c0_109 = arith.constant 0 : index
      %298 = vector.load %arg18[%c1_107, %c0_108, %c0_109] : memref<2x8x8xf32, #tpu.memory_space<vmem>>, vector<1x8x8xf32>
      %299 = vector.shape_cast %298 : vector<1x8x8xf32> to vector<8x8xf32>
      %300 = vector.shape_cast %291 : vector<8x8xf32> to vector<1x8x8xf32>
      tpu.vector_store %arg18[%c1_107, %c0_108, %c0_109], %300 {strides = array<i32>} : memref<2x8x8xf32, #tpu.memory_space<vmem>>, vector<1x8x8xf32>,
      %c1_110 = arith.constant 1 : index
      %c0_111 = arith.constant 0 : index
      %c0_112 = arith.constant 0 : index
      %301 = vector.load %arg19[%c1_110, %c0_111, %c0_112] : memref<2x8x8xf32, #tpu.memory_space<vmem>>, vector<1x8x8xf32>
      %302 = vector.shape_cast %301 : vector<1x8x8xf32> to vector<8x8xf32>
      %303 = vector.shape_cast %297 : vector<8x8xf32> to vector<1x8x8xf32>
      tpu.vector_store %arg19[%c1_110, %c0_111, %c0_112], %303 {strides = array<i32>} : memref<2x8x8xf32, #tpu.memory_space<vmem>>, vector<1x8x8xf32>,
      %304 = vector.extract_strided_slice %257 {offsets = [0, 0], sizes = [8, 4], strides = [1, 1]} : vector<8x16xf32> to vector<8x4xf32>
      %cst_113 = arith.constant dense<0xFF800000> : vector<8xf32>
      %305 = vector.multi_reduction <maximumf>, %304, %cst_113 [1] : vector<8x4xf32> to vector<8xf32>
      %306 = vector.shape_cast %305 : vector<8xf32> to vector<8x1xf32>
      %307 = vector.broadcast %306 : vector<8x1xf32> to vector<8x4xf32>
      %308 = arith.subf %304, %307 : vector<8x4xf32>
      %309 = math.exp %308 : vector<8x4xf32>
      %cst_114 = arith.constant dense<0.000000e+00> : vector<8xf32>
      %310 = vector.multi_reduction <add>, %309, %cst_114 [1] : vector<8x4xf32> to vector<8xf32>
      %311 = vector.shape_cast %310 : vector<8xf32> to vector<8x1xf32>
      %312 = tpu.reciprocal %311 {approx = true} : vector<8x1xf32> -> vector<8x1xf32>
      %313 = vector.broadcast %312 : vector<8x1xf32> to vector<8x4xf32>
      %314 = arith.mulf %309, %313 : vector<8x4xf32>
      %315 = vector.extract_strided_slice %314 {offsets = [0, 0], sizes = [8, 2], strides = [1, 1]} : vector<8x4xf32> to vector<8x2xf32>
      %316 = vector.extract_strided_slice %314 {offsets = [0, 2], sizes = [8, 2], strides = [1, 1]} : vector<8x4xf32> to vector<8x2xf32>
      %317 = vector.extract_strided_slice %257 {offsets = [0, 4], sizes = [8, 4], strides = [1, 1]} : vector<8x16xf32> to vector<8x4xf32>
      %cst_115 = arith.constant dense<0xFF800000> : vector<8xf32>
      %318 = vector.multi_reduction <maximumf>, %317, %cst_115 [1] : vector<8x4xf32> to vector<8xf32>
      %319 = vector.shape_cast %318 : vector<8xf32> to vector<8x1xf32>
      %320 = vector.broadcast %319 : vector<8x1xf32> to vector<8x4xf32>
      %321 = arith.subf %317, %320 : vector<8x4xf32>
      %322 = math.exp %321 : vector<8x4xf32>
      %cst_116 = arith.constant dense<0.000000e+00> : vector<8xf32>
      %323 = vector.multi_reduction <add>, %322, %cst_116 [1] : vector<8x4xf32> to vector<8xf32>
      %324 = vector.shape_cast %323 : vector<8xf32> to vector<8x1xf32>
      %325 = tpu.reciprocal %324 {approx = true} : vector<8x1xf32> -> vector<8x1xf32>
      %326 = vector.broadcast %325 : vector<8x1xf32> to vector<8x4xf32>
      %327 = arith.mulf %322, %326 : vector<8x4xf32>
      %328 = vector.extract_strided_slice %327 {offsets = [0, 0], sizes = [8, 2], strides = [1, 1]} : vector<8x4xf32> to vector<8x2xf32>
      %329 = vector.extract_strided_slice %327 {offsets = [0, 2], sizes = [8, 2], strides = [1, 1]} : vector<8x4xf32> to vector<8x2xf32>
      %330 = vector.extract_strided_slice %257 {offsets = [0, 8], sizes = [8, 4], strides = [1, 1]} : vector<8x16xf32> to vector<8x4xf32>
      %cst_117 = arith.constant dense<0xFF800000> : vector<8xf32>
      %331 = vector.multi_reduction <maximumf>, %330, %cst_117 [1] : vector<8x4xf32> to vector<8xf32>
      %332 = vector.shape_cast %331 : vector<8xf32> to vector<8x1xf32>
      %333 = vector.broadcast %332 : vector<8x1xf32> to vector<8x4xf32>
      %334 = arith.subf %330, %333 : vector<8x4xf32>
      %335 = math.exp %334 : vector<8x4xf32>
      %cst_118 = arith.constant dense<0.000000e+00> : vector<8xf32>
      %336 = vector.multi_reduction <add>, %335, %cst_118 [1] : vector<8x4xf32> to vector<8xf32>
      %337 = vector.shape_cast %336 : vector<8xf32> to vector<8x1xf32>
      %338 = tpu.reciprocal %337 {approx = true} : vector<8x1xf32> -> vector<8x1xf32>
      %339 = vector.broadcast %338 : vector<8x1xf32> to vector<8x4xf32>
      %340 = arith.mulf %335, %339 : vector<8x4xf32>
      %341 = vector.extract_strided_slice %340 {offsets = [0, 0], sizes = [8, 2], strides = [1, 1]} : vector<8x4xf32> to vector<8x2xf32>
      %342 = vector.extract_strided_slice %340 {offsets = [0, 2], sizes = [8, 2], strides = [1, 1]} : vector<8x4xf32> to vector<8x2xf32>
      %343 = vector.extract_strided_slice %257 {offsets = [0, 12], sizes = [8, 4], strides = [1, 1]} : vector<8x16xf32> to vector<8x4xf32>
      %cst_119 = arith.constant dense<0xFF800000> : vector<8xf32>
      %344 = vector.multi_reduction <maximumf>, %343, %cst_119 [1] : vector<8x4xf32> to vector<8xf32>
      %345 = vector.shape_cast %344 : vector<8xf32> to vector<8x1xf32>
      %346 = vector.broadcast %345 : vector<8x1xf32> to vector<8x4xf32>
      %347 = arith.subf %343, %346 : vector<8x4xf32>
      %348 = math.exp %347 : vector<8x4xf32>
      %cst_120 = arith.constant dense<0.000000e+00> : vector<8xf32>
      %349 = vector.multi_reduction <add>, %348, %cst_120 [1] : vector<8x4xf32> to vector<8xf32>
      %350 = vector.shape_cast %349 : vector<8xf32> to vector<8x1xf32>
      %351 = tpu.reciprocal %350 {approx = true} : vector<8x1xf32> -> vector<8x1xf32>
      %352 = vector.broadcast %351 : vector<8x1xf32> to vector<8x4xf32>
      %353 = arith.mulf %348, %352 : vector<8x4xf32>
      %354 = vector.extract_strided_slice %353 {offsets = [0, 0], sizes = [8, 2], strides = [1, 1]} : vector<8x4xf32> to vector<8x2xf32>
      %355 = vector.extract_strided_slice %353 {offsets = [0, 2], sizes = [8, 2], strides = [1, 1]} : vector<8x4xf32> to vector<8x2xf32>
      %356 = tpu.concatenate %315, %328, %341, %354 in 1 : vector<8x2xf32>, vector<8x2xf32>, vector<8x2xf32>, vector<8x2xf32> -> vector<8x8xf32>
      %c0_121 = arith.constant 0 : index
      %c0_122 = arith.constant 0 : index
      %c0_123 = arith.constant 0 : index
      %357 = vector.load %arg20[%c0_121, %c0_122, %c0_123] : memref<2x8x8xf32, #tpu.memory_space<vmem>>, vector<1x8x8xf32>
      %358 = vector.shape_cast %357 : vector<1x8x8xf32> to vector<8x8xf32>
      %359 = vector.shape_cast %356 : vector<8x8xf32> to vector<1x8x8xf32>
      tpu.vector_store %arg20[%c0_121, %c0_122, %c0_123], %359 {strides = array<i32>} : memref<2x8x8xf32, #tpu.memory_space<vmem>>, vector<1x8x8xf32>,
      %360 = tpu.concatenate %316, %329, %342, %355 in 1 : vector<8x2xf32>, vector<8x2xf32>, vector<8x2xf32>, vector<8x2xf32> -> vector<8x8xf32>
      %c1_124 = arith.constant 1 : index
      %c0_125 = arith.constant 0 : index
      %c0_126 = arith.constant 0 : index
      %361 = vector.load %arg20[%c1_124, %c0_125, %c0_126] : memref<2x8x8xf32, #tpu.memory_space<vmem>>, vector<1x8x8xf32>
      %362 = vector.shape_cast %361 : vector<1x8x8xf32> to vector<8x8xf32>
      %363 = vector.shape_cast %360 : vector<8x8xf32> to vector<1x8x8xf32>
      tpu.vector_store %arg20[%c1_124, %c0_125, %c0_126], %363 {strides = array<i32>} : memref<2x8x8xf32, #tpu.memory_space<vmem>>, vector<1x8x8xf32>,
      %cst_127 = arith.constant 0.000000e+00 : f32
      %364 = vector.broadcast %cst_127 : f32 to vector<8x32xf32>
      %c0_128 = arith.constant 0 : index
      %c0_129 = arith.constant 0 : index
      %365 = vector.load %arg21[%c0_128, %c0_129] : memref<8x32xf32, #tpu.memory_space<vmem>>, vector<8x32xf32>
      tpu.vector_store %arg21[%c0_128, %c0_129], %364 {strides = array<i32>} : memref<8x32xf32, #tpu.memory_space<vmem>>, vector<8x32xf32>,
    } else {
    }
    %3 = arith.index_cast %arg2 : i32 to index
    %4 = memref.load %arg3[%3] : memref<2xi32, #tpu.memory_space<smem>>
    %c0 = arith.constant 0 : index
    %c0_1 = arith.constant 0 : index
    %c0_2 = arith.constant 0 : index
    %5 = vector.load %arg18[%c0, %c0_1, %c0_2] : memref<2x8x8xf32, #tpu.memory_space<vmem>>, vector<1x8x8xf32>
    %6 = vector.shape_cast %5 : vector<1x8x8xf32> to vector<8x8xf32>
    %c0_3 = arith.constant 0 : index
    %c0_4 = arith.constant 0 : index
    %c0_5 = arith.constant 0 : index
    %7 = vector.load %arg19[%c0_3, %c0_4, %c0_5] : memref<2x8x8xf32, #tpu.memory_space<vmem>>, vector<1x8x8xf32>
    %8 = vector.shape_cast %7 : vector<1x8x8xf32> to vector<8x8xf32>
    %c0_6 = arith.constant 0 : index
    %c0_7 = arith.constant 0 : index
    %c0_8 = arith.constant 0 : index
    %9 = vector.load %arg20[%c0_6, %c0_7, %c0_8] : memref<2x8x8xf32, #tpu.memory_space<vmem>>, vector<1x8x8xf32>
    %10 = vector.shape_cast %9 : vector<1x8x8xf32> to vector<8x8xf32>
    %c1_i32 = arith.constant 1 : i32
    %11 = arith.cmpi eq, %4, %c1_i32 : i32
    %c1 = arith.constant 1 : index
    %c0_9 = arith.constant 0 : index
    %c0_10 = arith.constant 0 : index
    %12 = vector.load %arg18[%c1, %c0_9, %c0_10] : memref<2x8x8xf32, #tpu.memory_space<vmem>>, vector<1x8x8xf32>
    %13 = vector.shape_cast %12 : vector<1x8x8xf32> to vector<8x8xf32>
    %14 = arith.select %11, %13, %6 : vector<8x8xf32>
    %c1_11 = arith.constant 1 : index
    %c0_12 = arith.constant 0 : index
    %c0_13 = arith.constant 0 : index
    %15 = vector.load %arg19[%c1_11, %c0_12, %c0_13] : memref<2x8x8xf32, #tpu.memory_space<vmem>>, vector<1x8x8xf32>
    %16 = vector.shape_cast %15 : vector<1x8x8xf32> to vector<8x8xf32>
    %17 = arith.select %11, %16, %8 : vector<8x8xf32>
    %c1_14 = arith.constant 1 : index
    %c0_15 = arith.constant 0 : index
    %c0_16 = arith.constant 0 : index
    %18 = vector.load %arg20[%c1_14, %c0_15, %c0_16] : memref<2x8x8xf32, #tpu.memory_space<vmem>>, vector<1x8x8xf32>
    %19 = vector.shape_cast %18 : vector<1x8x8xf32> to vector<8x8xf32>
    %20 = arith.select %11, %19, %10 : vector<8x8xf32>
    %c0_17 = arith.constant 0 : index
    %c0_18 = arith.constant 0 : index
    %21 = vector.load %arg9[%c0_17, %c0_18] : memref<1x128xf32, #tpu.memory_space<vmem>>, vector<1x128xf32>
    %c0_19 = arith.constant 0 : index
    %c0_20 = arith.constant 0 : index
    %22 = vector.load %arg10[%c0_19, %c0_20] : memref<1x128xf32, #tpu.memory_space<vmem>>, vector<1x128xf32>
    %c0_21 = arith.constant 0 : index
    %c0_22 = arith.constant 0 : index
    %c0_23 = arith.constant 0 : index
    %23 = vector.load %arg8[%c0_21, %c0_22, %c0_23] : memref<1x1x128xf32, #tpu.memory_space<vmem>>, vector<1x1x128xf32>
    %24 = vector.shape_cast %23 : vector<1x1x128xf32> to vector<1x128xf32>
    %c0_24 = arith.constant 0 : index
    %c0_25 = arith.constant 0 : index
    %c0_26 = arith.constant 0 : index
    %25 = vector.load %arg7[%c0_24, %c0_25, %c0_26] : memref<1x128x32xbf16, #tpu.memory_space<vmem>>, vector<1x128x32xbf16>
    %26 = vector.shape_cast %25 : vector<1x128x32xbf16> to vector<128x32xbf16>
    %c0_27 = arith.constant 0 : index
    %c0_28 = arith.constant 0 : index
    %27 = vector.load %arg11[%c0_27, %c0_28] : memref<32x32xbf16, #tpu.memory_space<vmem>>, vector<32x32xbf16>
    %cst = arith.constant dense<0.000000e+00> : vector<128x32xf32>
    %28 = tpu.matmul %26, %27, %cst {dimension_numbers = #tpu.dot_dimension_numbers<[1], [0], [0], [1], [0, 0, 1, 1], [], []>} : vector<128x32xbf16>, vector<32x32xbf16>, vector<128x32xf32> -> vector<128x32xf32>
    %c0_29 = arith.constant 0 : index
    %c0_30 = arith.constant 0 : index
    %29 = vector.load %arg12[%c0_29, %c0_30] : memref<1x32xf32, #tpu.memory_space<vmem>>, vector<1x32xf32>
    %30 = vector.broadcast %29 : vector<1x32xf32> to vector<128x32xf32>
    %31 = arith.addf %28, %30 : vector<128x32xf32>
    %32 = arith.truncf %31 : vector<128x32xf32> to vector<128x32xbf16>
    %33 = vector.extract_strided_slice %14 {offsets = [0, 0], sizes = [8, 1], strides = [1, 1]} : vector<8x8xf32> to vector<8x1xf32>
    %34 = vector.broadcast %33 : vector<8x1xf32> to vector<8x128xf32>
    %35 = vector.broadcast %21 : vector<1x128xf32> to vector<8x128xf32>
    %36 = arith.subf %34, %35 : vector<8x128xf32>
    %37 = math.absf %36 : vector<8x128xf32>
    %cst_31 = arith.constant 1.000000e+00 : f32
    %38 = vector.broadcast %cst_31 : f32 to vector<8x128xf32>
    %39 = arith.subf %38, %37 : vector<8x128xf32>
    %cst_32 = arith.constant 0.000000e+00 : f32
    %40 = vector.broadcast %cst_32 : f32 to vector<8x128xf32>
    %41 = arith.maximumf %39, %40 : vector<8x128xf32>
    %42 = vector.extract_strided_slice %17 {offsets = [0, 0], sizes = [8, 1], strides = [1, 1]} : vector<8x8xf32> to vector<8x1xf32>
    %43 = vector.broadcast %42 : vector<8x1xf32> to vector<8x128xf32>
    %44 = vector.broadcast %22 : vector<1x128xf32> to vector<8x128xf32>
    %45 = arith.subf %43, %44 : vector<8x128xf32>
    %46 = math.absf %45 : vector<8x128xf32>
    %cst_33 = arith.constant 1.000000e+00 : f32
    %47 = vector.broadcast %cst_33 : f32 to vector<8x128xf32>
    %48 = arith.subf %47, %46 : vector<8x128xf32>
    %cst_34 = arith.constant 0.000000e+00 : f32
    %49 = vector.broadcast %cst_34 : f32 to vector<8x128xf32>
    %50 = arith.maximumf %48, %49 : vector<8x128xf32>
    %51 = arith.mulf %41, %50 : vector<8x128xf32>
    %52 = vector.extract_strided_slice %20 {offsets = [0, 0], sizes = [8, 1], strides = [1, 1]} : vector<8x8xf32> to vector<8x1xf32>
    %53 = vector.broadcast %52 : vector<8x1xf32> to vector<8x128xf32>
    %54 = arith.mulf %51, %53 : vector<8x128xf32>
    %55 = vector.extract_strided_slice %14 {offsets = [0, 1], sizes = [8, 1], strides = [1, 1]} : vector<8x8xf32> to vector<8x1xf32>
    %56 = vector.broadcast %55 : vector<8x1xf32> to vector<8x128xf32>
    %57 = vector.broadcast %21 : vector<1x128xf32> to vector<8x128xf32>
    %58 = arith.subf %56, %57 : vector<8x128xf32>
    %59 = math.absf %58 : vector<8x128xf32>
    %cst_35 = arith.constant 1.000000e+00 : f32
    %60 = vector.broadcast %cst_35 : f32 to vector<8x128xf32>
    %61 = arith.subf %60, %59 : vector<8x128xf32>
    %cst_36 = arith.constant 0.000000e+00 : f32
    %62 = vector.broadcast %cst_36 : f32 to vector<8x128xf32>
    %63 = arith.maximumf %61, %62 : vector<8x128xf32>
    %64 = vector.extract_strided_slice %17 {offsets = [0, 1], sizes = [8, 1], strides = [1, 1]} : vector<8x8xf32> to vector<8x1xf32>
    %65 = vector.broadcast %64 : vector<8x1xf32> to vector<8x128xf32>
    %66 = vector.broadcast %22 : vector<1x128xf32> to vector<8x128xf32>
    %67 = arith.subf %65, %66 : vector<8x128xf32>
    %68 = math.absf %67 : vector<8x128xf32>
    %cst_37 = arith.constant 1.000000e+00 : f32
    %69 = vector.broadcast %cst_37 : f32 to vector<8x128xf32>
    %70 = arith.subf %69, %68 : vector<8x128xf32>
    %cst_38 = arith.constant 0.000000e+00 : f32
    %71 = vector.broadcast %cst_38 : f32 to vector<8x128xf32>
    %72 = arith.maximumf %70, %71 : vector<8x128xf32>
    %73 = arith.mulf %63, %72 : vector<8x128xf32>
    %74 = vector.extract_strided_slice %20 {offsets = [0, 1], sizes = [8, 1], strides = [1, 1]} : vector<8x8xf32> to vector<8x1xf32>
    %75 = vector.broadcast %74 : vector<8x1xf32> to vector<8x128xf32>
    %76 = arith.mulf %73, %75 : vector<8x128xf32>
    %77 = arith.addf %54, %76 : vector<8x128xf32>
    %78 = vector.broadcast %24 : vector<1x128xf32> to vector<8x128xf32>
    %79 = arith.mulf %77, %78 : vector<8x128xf32>
    %c0_39 = arith.constant 0 : index
    %c0_40 = arith.constant 0 : index
    %80 = vector.load %arg21[%c0_39, %c0_40] : memref<8x32xf32, #tpu.memory_space<vmem>>, vector<8x8xf32>
    %81 = arith.truncf %79 : vector<8x128xf32> to vector<8x128xbf16>
    %82 = vector.extract_strided_slice %32 {offsets = [0, 0], sizes = [128, 8], strides = [1, 1]} : vector<128x32xbf16> to vector<128x8xbf16>
    %cst_41 = arith.constant dense<0.000000e+00> : vector<8x8xf32>
    %83 = tpu.matmul %81, %82, %cst_41 {dimension_numbers = #tpu.dot_dimension_numbers<[1], [0], [0], [1], [0, 0, 1, 1], [], []>} : vector<8x128xbf16>, vector<128x8xbf16>, vector<8x8xf32> -> vector<8x8xf32>
    %84 = arith.addf %80, %83 : vector<8x8xf32>
    %c0_42 = arith.constant 0 : index
    %c0_43 = arith.constant 0 : index
    %85 = vector.load %arg21[%c0_42, %c0_43] : memref<8x32xf32, #tpu.memory_space<vmem>>, vector<8x8xf32>
    tpu.vector_store %arg21[%c0_42, %c0_43], %84 {strides = array<i32>} : memref<8x32xf32, #tpu.memory_space<vmem>>, vector<8x8xf32>,
    %86 = vector.extract_strided_slice %14 {offsets = [0, 2], sizes = [8, 1], strides = [1, 1]} : vector<8x8xf32> to vector<8x1xf32>
    %87 = vector.broadcast %86 : vector<8x1xf32> to vector<8x128xf32>
    %88 = vector.broadcast %21 : vector<1x128xf32> to vector<8x128xf32>
    %89 = arith.subf %87, %88 : vector<8x128xf32>
    %90 = math.absf %89 : vector<8x128xf32>
    %cst_44 = arith.constant 1.000000e+00 : f32
    %91 = vector.broadcast %cst_44 : f32 to vector<8x128xf32>
    %92 = arith.subf %91, %90 : vector<8x128xf32>
    %cst_45 = arith.constant 0.000000e+00 : f32
    %93 = vector.broadcast %cst_45 : f32 to vector<8x128xf32>
    %94 = arith.maximumf %92, %93 : vector<8x128xf32>
    %95 = vector.extract_strided_slice %17 {offsets = [0, 2], sizes = [8, 1], strides = [1, 1]} : vector<8x8xf32> to vector<8x1xf32>
    %96 = vector.broadcast %95 : vector<8x1xf32> to vector<8x128xf32>
    %97 = vector.broadcast %22 : vector<1x128xf32> to vector<8x128xf32>
    %98 = arith.subf %96, %97 : vector<8x128xf32>
    %99 = math.absf %98 : vector<8x128xf32>
    %cst_46 = arith.constant 1.000000e+00 : f32
    %100 = vector.broadcast %cst_46 : f32 to vector<8x128xf32>
    %101 = arith.subf %100, %99 : vector<8x128xf32>
    %cst_47 = arith.constant 0.000000e+00 : f32
    %102 = vector.broadcast %cst_47 : f32 to vector<8x128xf32>
    %103 = arith.maximumf %101, %102 : vector<8x128xf32>
    %104 = arith.mulf %94, %103 : vector<8x128xf32>
    %105 = vector.extract_strided_slice %20 {offsets = [0, 2], sizes = [8, 1], strides = [1, 1]} : vector<8x8xf32> to vector<8x1xf32>
    %106 = vector.broadcast %105 : vector<8x1xf32> to vector<8x128xf32>
    %107 = arith.mulf %104, %106 : vector<8x128xf32>
    %108 = vector.extract_strided_slice %14 {offsets = [0, 3], sizes = [8, 1], strides = [1, 1]} : vector<8x8xf32> to vector<8x1xf32>
    %109 = vector.broadcast %108 : vector<8x1xf32> to vector<8x128xf32>
    %110 = vector.broadcast %21 : vector<1x128xf32> to vector<8x128xf32>
    %111 = arith.subf %109, %110 : vector<8x128xf32>
    %112 = math.absf %111 : vector<8x128xf32>
    %cst_48 = arith.constant 1.000000e+00 : f32
    %113 = vector.broadcast %cst_48 : f32 to vector<8x128xf32>
    %114 = arith.subf %113, %112 : vector<8x128xf32>
    %cst_49 = arith.constant 0.000000e+00 : f32
    %115 = vector.broadcast %cst_49 : f32 to vector<8x128xf32>
    %116 = arith.maximumf %114, %115 : vector<8x128xf32>
    %117 = vector.extract_strided_slice %17 {offsets = [0, 3], sizes = [8, 1], strides = [1, 1]} : vector<8x8xf32> to vector<8x1xf32>
    %118 = vector.broadcast %117 : vector<8x1xf32> to vector<8x128xf32>
    %119 = vector.broadcast %22 : vector<1x128xf32> to vector<8x128xf32>
    %120 = arith.subf %118, %119 : vector<8x128xf32>
    %121 = math.absf %120 : vector<8x128xf32>
    %cst_50 = arith.constant 1.000000e+00 : f32
    %122 = vector.broadcast %cst_50 : f32 to vector<8x128xf32>
    %123 = arith.subf %122, %121 : vector<8x128xf32>
    %cst_51 = arith.constant 0.000000e+00 : f32
    %124 = vector.broadcast %cst_51 : f32 to vector<8x128xf32>
    %125 = arith.maximumf %123, %124 : vector<8x128xf32>
    %126 = arith.mulf %116, %125 : vector<8x128xf32>
    %127 = vector.extract_strided_slice %20 {offsets = [0, 3], sizes = [8, 1], strides = [1, 1]} : vector<8x8xf32> to vector<8x1xf32>
    %128 = vector.broadcast %127 : vector<8x1xf32> to vector<8x128xf32>
    %129 = arith.mulf %126, %128 : vector<8x128xf32>
    %130 = arith.addf %107, %129 : vector<8x128xf32>
    %131 = vector.broadcast %24 : vector<1x128xf32> to vector<8x128xf32>
    %132 = arith.mulf %130, %131 : vector<8x128xf32>
    %c0_52 = arith.constant 0 : index
    %c8 = arith.constant 8 : index
    %133 = vector.load %arg21[%c0_52, %c8] : memref<8x32xf32, #tpu.memory_space<vmem>>, vector<8x8xf32>
    %134 = arith.truncf %132 : vector<8x128xf32> to vector<8x128xbf16>
    %135 = vector.extract_strided_slice %32 {offsets = [0, 8], sizes = [128, 8], strides = [1, 1]} : vector<128x32xbf16> to vector<128x8xbf16>
    %cst_53 = arith.constant dense<0.000000e+00> : vector<8x8xf32>
    %136 = tpu.matmul %134, %135, %cst_53 {dimension_numbers = #tpu.dot_dimension_numbers<[1], [0], [0], [1], [0, 0, 1, 1], [], []>} : vector<8x128xbf16>, vector<128x8xbf16>, vector<8x8xf32> -> vector<8x8xf32>
    %137 = arith.addf %133, %136 : vector<8x8xf32>
    %c0_54 = arith.constant 0 : index
    %c8_55 = arith.constant 8 : index
    %138 = vector.load %arg21[%c0_54, %c8_55] : memref<8x32xf32, #tpu.memory_space<vmem>>, vector<8x8xf32>
    tpu.vector_store %arg21[%c0_54, %c8_55], %137 {strides = array<i32>} : memref<8x32xf32, #tpu.memory_space<vmem>>, vector<8x8xf32>,
    %139 = vector.extract_strided_slice %14 {offsets = [0, 4], sizes = [8, 1], strides = [1, 1]} : vector<8x8xf32> to vector<8x1xf32>
    %140 = vector.broadcast %139 : vector<8x1xf32> to vector<8x128xf32>
    %141 = vector.broadcast %21 : vector<1x128xf32> to vector<8x128xf32>
    %142 = arith.subf %140, %141 : vector<8x128xf32>
    %143 = math.absf %142 : vector<8x128xf32>
    %cst_56 = arith.constant 1.000000e+00 : f32
    %144 = vector.broadcast %cst_56 : f32 to vector<8x128xf32>
    %145 = arith.subf %144, %143 : vector<8x128xf32>
    %cst_57 = arith.constant 0.000000e+00 : f32
    %146 = vector.broadcast %cst_57 : f32 to vector<8x128xf32>
    %147 = arith.maximumf %145, %146 : vector<8x128xf32>
    %148 = vector.extract_strided_slice %17 {offsets = [0, 4], sizes = [8, 1], strides = [1, 1]} : vector<8x8xf32> to vector<8x1xf32>
    %149 = vector.broadcast %148 : vector<8x1xf32> to vector<8x128xf32>
    %150 = vector.broadcast %22 : vector<1x128xf32> to vector<8x128xf32>
    %151 = arith.subf %149, %150 : vector<8x128xf32>
    %152 = math.absf %151 : vector<8x128xf32>
    %cst_58 = arith.constant 1.000000e+00 : f32
    %153 = vector.broadcast %cst_58 : f32 to vector<8x128xf32>
    %154 = arith.subf %153, %152 : vector<8x128xf32>
    %cst_59 = arith.constant 0.000000e+00 : f32
    %155 = vector.broadcast %cst_59 : f32 to vector<8x128xf32>
    %156 = arith.maximumf %154, %155 : vector<8x128xf32>
    %157 = arith.mulf %147, %156 : vector<8x128xf32>
    %158 = vector.extract_strided_slice %20 {offsets = [0, 4], sizes = [8, 1], strides = [1, 1]} : vector<8x8xf32> to vector<8x1xf32>
    %159 = vector.broadcast %158 : vector<8x1xf32> to vector<8x128xf32>
    %160 = arith.mulf %157, %159 : vector<8x128xf32>
    %161 = vector.extract_strided_slice %14 {offsets = [0, 5], sizes = [8, 1], strides = [1, 1]} : vector<8x8xf32> to vector<8x1xf32>
    %162 = vector.broadcast %161 : vector<8x1xf32> to vector<8x128xf32>
    %163 = vector.broadcast %21 : vector<1x128xf32> to vector<8x128xf32>
    %164 = arith.subf %162, %163 : vector<8x128xf32>
    %165 = math.absf %164 : vector<8x128xf32>
    %cst_60 = arith.constant 1.000000e+00 : f32
    %166 = vector.broadcast %cst_60 : f32 to vector<8x128xf32>
    %167 = arith.subf %166, %165 : vector<8x128xf32>
    %cst_61 = arith.constant 0.000000e+00 : f32
    %168 = vector.broadcast %cst_61 : f32 to vector<8x128xf32>
    %169 = arith.maximumf %167, %168 : vector<8x128xf32>
    %170 = vector.extract_strided_slice %17 {offsets = [0, 5], sizes = [8, 1], strides = [1, 1]} : vector<8x8xf32> to vector<8x1xf32>
    %171 = vector.broadcast %170 : vector<8x1xf32> to vector<8x128xf32>
    %172 = vector.broadcast %22 : vector<1x128xf32> to vector<8x128xf32>
    %173 = arith.subf %171, %172 : vector<8x128xf32>
    %174 = math.absf %173 : vector<8x128xf32>
    %cst_62 = arith.constant 1.000000e+00 : f32
    %175 = vector.broadcast %cst_62 : f32 to vector<8x128xf32>
    %176 = arith.subf %175, %174 : vector<8x128xf32>
    %cst_63 = arith.constant 0.000000e+00 : f32
    %177 = vector.broadcast %cst_63 : f32 to vector<8x128xf32>
    %178 = arith.maximumf %176, %177 : vector<8x128xf32>
    %179 = arith.mulf %169, %178 : vector<8x128xf32>
    %180 = vector.extract_strided_slice %20 {offsets = [0, 5], sizes = [8, 1], strides = [1, 1]} : vector<8x8xf32> to vector<8x1xf32>
    %181 = vector.broadcast %180 : vector<8x1xf32> to vector<8x128xf32>
    %182 = arith.mulf %179, %181 : vector<8x128xf32>
    %183 = arith.addf %160, %182 : vector<8x128xf32>
    %184 = vector.broadcast %24 : vector<1x128xf32> to vector<8x128xf32>
    %185 = arith.mulf %183, %184 : vector<8x128xf32>
    %c0_64 = arith.constant 0 : index
    %c16 = arith.constant 16 : index
    %186 = vector.load %arg21[%c0_64, %c16] : memref<8x32xf32, #tpu.memory_space<vmem>>, vector<8x8xf32>
    %187 = arith.truncf %185 : vector<8x128xf32> to vector<8x128xbf16>
    %188 = vector.extract_strided_slice %32 {offsets = [0, 16], sizes = [128, 8], strides = [1, 1]} : vector<128x32xbf16> to vector<128x8xbf16>
    %cst_65 = arith.constant dense<0.000000e+00> : vector<8x8xf32>
    %189 = tpu.matmul %187, %188, %cst_65 {dimension_numbers = #tpu.dot_dimension_numbers<[1], [0], [0], [1], [0, 0, 1, 1], [], []>} : vector<8x128xbf16>, vector<128x8xbf16>, vector<8x8xf32> -> vector<8x8xf32>
    %190 = arith.addf %186, %189 : vector<8x8xf32>
    %c0_66 = arith.constant 0 : index
    %c16_67 = arith.constant 16 : index
    %191 = vector.load %arg21[%c0_66, %c16_67] : memref<8x32xf32, #tpu.memory_space<vmem>>, vector<8x8xf32>
    tpu.vector_store %arg21[%c0_66, %c16_67], %190 {strides = array<i32>} : memref<8x32xf32, #tpu.memory_space<vmem>>, vector<8x8xf32>,
    %192 = vector.extract_strided_slice %14 {offsets = [0, 6], sizes = [8, 1], strides = [1, 1]} : vector<8x8xf32> to vector<8x1xf32>
    %193 = vector.broadcast %192 : vector<8x1xf32> to vector<8x128xf32>
    %194 = vector.broadcast %21 : vector<1x128xf32> to vector<8x128xf32>
    %195 = arith.subf %193, %194 : vector<8x128xf32>
    %196 = math.absf %195 : vector<8x128xf32>
    %cst_68 = arith.constant 1.000000e+00 : f32
    %197 = vector.broadcast %cst_68 : f32 to vector<8x128xf32>
    %198 = arith.subf %197, %196 : vector<8x128xf32>
    %cst_69 = arith.constant 0.000000e+00 : f32
    %199 = vector.broadcast %cst_69 : f32 to vector<8x128xf32>
    %200 = arith.maximumf %198, %199 : vector<8x128xf32>
    %201 = vector.extract_strided_slice %17 {offsets = [0, 6], sizes = [8, 1], strides = [1, 1]} : vector<8x8xf32> to vector<8x1xf32>
    %202 = vector.broadcast %201 : vector<8x1xf32> to vector<8x128xf32>
    %203 = vector.broadcast %22 : vector<1x128xf32> to vector<8x128xf32>
    %204 = arith.subf %202, %203 : vector<8x128xf32>
    %205 = math.absf %204 : vector<8x128xf32>
    %cst_70 = arith.constant 1.000000e+00 : f32
    %206 = vector.broadcast %cst_70 : f32 to vector<8x128xf32>
    %207 = arith.subf %206, %205 : vector<8x128xf32>
    %cst_71 = arith.constant 0.000000e+00 : f32
    %208 = vector.broadcast %cst_71 : f32 to vector<8x128xf32>
    %209 = arith.maximumf %207, %208 : vector<8x128xf32>
    %210 = arith.mulf %200, %209 : vector<8x128xf32>
    %211 = vector.extract_strided_slice %20 {offsets = [0, 6], sizes = [8, 1], strides = [1, 1]} : vector<8x8xf32> to vector<8x1xf32>
    %212 = vector.broadcast %211 : vector<8x1xf32> to vector<8x128xf32>
    %213 = arith.mulf %210, %212 : vector<8x128xf32>
    %214 = vector.extract_strided_slice %14 {offsets = [0, 7], sizes = [8, 1], strides = [1, 1]} : vector<8x8xf32> to vector<8x1xf32>
    %215 = vector.broadcast %214 : vector<8x1xf32> to vector<8x128xf32>
    %216 = vector.broadcast %21 : vector<1x128xf32> to vector<8x128xf32>
    %217 = arith.subf %215, %216 : vector<8x128xf32>
    %218 = math.absf %217 : vector<8x128xf32>
    %cst_72 = arith.constant 1.000000e+00 : f32
    %219 = vector.broadcast %cst_72 : f32 to vector<8x128xf32>
    %220 = arith.subf %219, %218 : vector<8x128xf32>
    %cst_73 = arith.constant 0.000000e+00 : f32
    %221 = vector.broadcast %cst_73 : f32 to vector<8x128xf32>
    %222 = arith.maximumf %220, %221 : vector<8x128xf32>
    %223 = vector.extract_strided_slice %17 {offsets = [0, 7], sizes = [8, 1], strides = [1, 1]} : vector<8x8xf32> to vector<8x1xf32>
    %224 = vector.broadcast %223 : vector<8x1xf32> to vector<8x128xf32>
    %225 = vector.broadcast %22 : vector<1x128xf32> to vector<8x128xf32>
    %226 = arith.subf %224, %225 : vector<8x128xf32>
    %227 = math.absf %226 : vector<8x128xf32>
    %cst_74 = arith.constant 1.000000e+00 : f32
    %228 = vector.broadcast %cst_74 : f32 to vector<8x128xf32>
    %229 = arith.subf %228, %227 : vector<8x128xf32>
    %cst_75 = arith.constant 0.000000e+00 : f32
    %230 = vector.broadcast %cst_75 : f32 to vector<8x128xf32>
    %231 = arith.maximumf %229, %230 : vector<8x128xf32>
    %232 = arith.mulf %222, %231 : vector<8x128xf32>
    %233 = vector.extract_strided_slice %20 {offsets = [0, 7], sizes = [8, 1], strides = [1, 1]} : vector<8x8xf32> to vector<8x1xf32>
    %234 = vector.broadcast %233 : vector<8x1xf32> to vector<8x128xf32>
    %235 = arith.mulf %232, %234 : vector<8x128xf32>
    %236 = arith.addf %213, %235 : vector<8x128xf32>
    %237 = vector.broadcast %24 : vector<1x128xf32> to vector<8x128xf32>
    %238 = arith.mulf %236, %237 : vector<8x128xf32>
    %c0_76 = arith.constant 0 : index
    %c24 = arith.constant 24 : index
    %239 = vector.load %arg21[%c0_76, %c24] : memref<8x32xf32, #tpu.memory_space<vmem>>, vector<8x8xf32>
    %240 = arith.truncf %238 : vector<8x128xf32> to vector<8x128xbf16>
    %241 = vector.extract_strided_slice %32 {offsets = [0, 24], sizes = [128, 8], strides = [1, 1]} : vector<128x32xbf16> to vector<128x8xbf16>
    %cst_77 = arith.constant dense<0.000000e+00> : vector<8x8xf32>
    %242 = tpu.matmul %240, %241, %cst_77 {dimension_numbers = #tpu.dot_dimension_numbers<[1], [0], [0], [1], [0, 0, 1, 1], [], []>} : vector<8x128xbf16>, vector<128x8xbf16>, vector<8x8xf32> -> vector<8x8xf32>
    %243 = arith.addf %239, %242 : vector<8x8xf32>
    %c0_78 = arith.constant 0 : index
    %c24_79 = arith.constant 24 : index
    %244 = vector.load %arg21[%c0_78, %c24_79] : memref<8x32xf32, #tpu.memory_space<vmem>>, vector<8x8xf32>
    tpu.vector_store %arg21[%c0_78, %c24_79], %243 {strides = array<i32>} : memref<8x32xf32, #tpu.memory_space<vmem>>, vector<8x8xf32>,
    %c1_i32_80 = arith.constant 1 : i32
    %245 = arith.cmpi eq, %arg2, %c1_i32_80 : i32
    %246 = arith.extui %245 : i1 to i32
    %c0_i32_81 = arith.constant 0 : i32
    %247 = arith.cmpi ne, %246, %c0_i32_81 : i32
    scf.if %247 {
      %c0_82 = arith.constant 0 : index
      %c0_83 = arith.constant 0 : index
      %248 = vector.load %arg21[%c0_82, %c0_83] : memref<8x32xf32, #tpu.memory_space<vmem>>, vector<8x32xf32>
      %249 = arith.truncf %248 : vector<8x32xf32> to vector<8x32xbf16>
      %c0_84 = arith.constant 0 : index
      %c0_85 = arith.constant 0 : index
      %250 = vector.load %arg15[%c0_84, %c0_85] : memref<32x32xbf16, #tpu.memory_space<vmem>>, vector<32x32xbf16>
      %cst_86 = arith.constant dense<0.000000e+00> : vector<8x32xf32>
      %251 = tpu.matmul %249, %250, %cst_86 {dimension_numbers = #tpu.dot_dimension_numbers<[1], [0], [0], [1], [0, 0, 1, 1], [], []>} : vector<8x32xbf16>, vector<32x32xbf16>, vector<8x32xf32> -> vector<8x32xf32>
      %c0_87 = arith.constant 0 : index
      %c0_88 = arith.constant 0 : index
      %252 = vector.load %arg16[%c0_87, %c0_88] : memref<1x32xf32, #tpu.memory_space<vmem>>, vector<1x32xf32>
      %253 = vector.broadcast %252 : vector<1x32xf32> to vector<8x32xf32>
      %254 = arith.addf %251, %253 : vector<8x32xf32>
      %c0_89 = arith.constant 0 : index
      %c0_90 = arith.constant 0 : index
      %c0_91 = arith.constant 0 : index
      %255 = vector.load %arg6[%c0_89, %c0_90, %c0_91] : memref<1x8x32xf32, #tpu.memory_space<vmem>>, vector<1x8x32xf32>
      %256 = vector.shape_cast %255 : vector<1x8x32xf32> to vector<8x32xf32>
      %257 = arith.addf %254, %256 : vector<8x32xf32>
      %c0_92 = arith.constant 0 : index
      %c0_93 = arith.constant 0 : index
      %c0_94 = arith.constant 0 : index
      %258 = vector.load %arg17[%c0_92, %c0_93, %c0_94] : memref<1x8x32xf32, #tpu.memory_space<vmem>>, vector<1x8x32xf32>
      %259 = vector.shape_cast %258 : vector<1x8x32xf32> to vector<8x32xf32>
      %260 = vector.shape_cast %257 : vector<8x32xf32> to vector<1x8x32xf32>
      tpu.vector_store %arg17[%c0_92, %c0_93, %c0_94], %260 {strides = array<i32>} : memref<1x8x32xf32, #tpu.memory_space<vmem>>, vector<1x8x32xf32>,
    } else {
    }
    return
  }
  func.func @transform_0(%arg0: i32, %arg1: i32, %arg2: i32, %arg3: memref<2xi32, #tpu.memory_space<smem>>) -> (i32, i32, i32) {
    %c0_i32 = arith.constant 0 : i32
    %c0_i32_0 = arith.constant 0 : i32
    return %arg0, %arg1, %c0_i32 : i32, i32, i32
  }
  func.func @transform_1(%arg0: i32, %arg1: i32, %arg2: i32, %arg3: memref<2xi32, #tpu.memory_space<smem>>) -> (i32, i32, i32) {
    %c0_i32 = arith.constant 0 : i32
    %c0_i32_0 = arith.constant 0 : i32
    return %arg0, %arg1, %c0_i32 : i32, i32, i32
  }
  func.func @transform_2(%arg0: i32, %arg1: i32, %arg2: i32, %arg3: memref<2xi32, #tpu.memory_space<smem>>) -> (i32, i32, i32) {
    %c0_i32 = arith.constant 0 : i32
    %c0_i32_0 = arith.constant 0 : i32
    return %arg0, %arg1, %c0_i32 : i32, i32, i32
  }
  func.func @transform_3(%arg0: i32, %arg1: i32, %arg2: i32, %arg3: memref<2xi32, #tpu.memory_space<smem>>) -> (i32, i32, i32) {
    %c0_i32 = arith.constant 0 : i32
    %c0_i32_0 = arith.constant 0 : i32
    return %arg0, %arg2, %c0_i32 : i32, i32, i32
  }
  func.func @transform_4(%arg0: i32, %arg1: i32, %arg2: i32, %arg3: memref<2xi32, #tpu.memory_space<smem>>) -> (i32, i32, i32) {
    %c0_i32 = arith.constant 0 : i32
    %c0_i32_0 = arith.constant 0 : i32
    return %arg0, %c0_i32, %arg2 : i32, i32, i32
  }
  func.func @transform_5(%arg0: i32, %arg1: i32, %arg2: i32, %arg3: memref<2xi32, #tpu.memory_space<smem>>) -> (i32, i32) {
    %c0_i32 = arith.constant 0 : i32
    %c0_i32_0 = arith.constant 0 : i32
    return %c0_i32, %arg2 : i32, i32
  }
  func.func @transform_6(%arg0: i32, %arg1: i32, %arg2: i32, %arg3: memref<2xi32, #tpu.memory_space<smem>>) -> (i32, i32) {
    %c0_i32 = arith.constant 0 : i32
    %c0_i32_0 = arith.constant 0 : i32
    return %c0_i32, %arg2 : i32, i32
  }
  func.func @transform_7(%arg0: i32, %arg1: i32, %arg2: i32, %arg3: memref<2xi32, #tpu.memory_space<smem>>) -> (i32, i32) {
    %c0_i32 = arith.constant 0 : i32
    %c0_i32_0 = arith.constant 0 : i32
    %c0_i32_1 = arith.constant 0 : i32
    return %c0_i32, %c0_i32_0 : i32, i32
  }
  func.func @transform_8(%arg0: i32, %arg1: i32, %arg2: i32, %arg3: memref<2xi32, #tpu.memory_space<smem>>) -> (i32, i32) {
    %c0_i32 = arith.constant 0 : i32
    %c0_i32_0 = arith.constant 0 : i32
    %c0_i32_1 = arith.constant 0 : i32
    return %c0_i32, %c0_i32_0 : i32, i32
  }
  func.func @transform_9(%arg0: i32, %arg1: i32, %arg2: i32, %arg3: memref<2xi32, #tpu.memory_space<smem>>) -> (i32, i32) {
    %c0_i32 = arith.constant 0 : i32
    %c0_i32_0 = arith.constant 0 : i32
    %c0_i32_1 = arith.constant 0 : i32
    return %c0_i32, %c0_i32_0 : i32, i32
  }
  func.func @transform_10(%arg0: i32, %arg1: i32, %arg2: i32, %arg3: memref<2xi32, #tpu.memory_space<smem>>) -> (i32, i32) {
    %c0_i32 = arith.constant 0 : i32
    %c0_i32_0 = arith.constant 0 : i32
    %c0_i32_1 = arith.constant 0 : i32
    return %c0_i32, %c0_i32_0 : i32, i32
  }
  func.func @transform_11(%arg0: i32, %arg1: i32, %arg2: i32, %arg3: memref<2xi32, #tpu.memory_space<smem>>) -> (i32, i32) {
    %c0_i32 = arith.constant 0 : i32
    %c0_i32_0 = arith.constant 0 : i32
    %c0_i32_1 = arith.constant 0 : i32
    return %c0_i32, %c0_i32_0 : i32, i32
  }
  func.func @transform_12(%arg0: i32, %arg1: i32, %arg2: i32, %arg3: memref<2xi32, #tpu.memory_space<smem>>) -> (i32, i32) {
    %c0_i32 = arith.constant 0 : i32
    %c0_i32_0 = arith.constant 0 : i32
    %c0_i32_1 = arith.constant 0 : i32
    return %c0_i32, %c0_i32_0 : i32, i32
  }
  func.func @transform_13(%arg0: i32, %arg1: i32, %arg2: i32, %arg3: memref<2xi32, #tpu.memory_space<smem>>) -> (i32, i32, i32) {
    %c0_i32 = arith.constant 0 : i32
    %c0_i32_0 = arith.constant 0 : i32
    return %arg0, %arg1, %c0_i32 : i32, i32, i32
  }
}

</mosaic_0001>

<llo_original>
// kernel: tpu_custom_call.1
$region0: #{tpu_custom_call.1}
  #allocation0 [shape = 'u32[]', space=smem, size = 0x4, offset = 0x4, fixed_abs, tag = 'smem constant byte address 0x4 - core index']
  #allocation1 [shape = 'u32[72,128]{1,0:T(1,128)}', space=vmem, size = 0x9000, scoped, tag = 'internal scratch']
  #allocation2 [shape = 'f32[2,8,8]{2,1,0:T(8,128)}', space=vmem, size = 0x2000, scoped, tag = 'scratch operand']
  #allocation3 [shape = 'f32[2,8,8]{2,1,0:T(8,128)}', space=vmem, size = 0x2000, scoped, tag = 'scratch operand']
  #allocation4 [shape = 'f32[2,8,8]{2,1,0:T(8,128)}', space=vmem, size = 0x2000, scoped, tag = 'scratch operand']
  #allocation5 [shape = 'f32[8,32]{1,0:T(8,128)}', space=vmem, size = 0x1000, scoped, tag = 'scratch operand']
  #allocation6 [shape = 's32[1]{0}', space=sflag, size = 0x4, scoped, tag = 'scoped memory for tpu_custom_call.1']
  #allocation7 [shape = 'u8[512]{0}', space=smem, size = 0x200, scoped, tag = 'prefetched SMEM operand 0']
  %s0 = inlined_call_operand.vmem [shape: s32[2], index: 0, kind: input, shape index: {}]
  %s1 = inlined_call_operand.vmem [shape: f32[2,8,32], index: 1, kind: input, shape index: {}]
  %s2 = inlined_call_operand.vmem [shape: f32[2,8,4], index: 2, kind: input, shape index: {}]
  %s3 = inlined_call_operand.vmem [shape: f32[2,8,32], index: 3, kind: input, shape index: {}]
  %s4 = inlined_call_operand.vmem [shape: bf16[2,256,32], index: 4, kind: input, shape index: {}]
  %s5 = inlined_call_operand.vmem [shape: f32[2,1,256], index: 5, kind: input, shape index: {}]
  %s6 = inlined_call_operand.vmem [shape: f32[1,256], index: 6, kind: input, shape index: {}]
  %s7 = inlined_call_operand.vmem [shape: f32[1,256], index: 7, kind: input, shape index: {}]
  %s8 = inlined_call_operand.vmem [shape: bf16[32,32], index: 8, kind: input, shape index: {}]
  %s9 = inlined_call_operand.vmem [shape: f32[1,32], index: 9, kind: input, shape index: {}]
  %s10 = inlined_call_operand.vmem [shape: bf16[32,48], index: 10, kind: input, shape index: {}]
  %s11 = inlined_call_operand.vmem [shape: f32[1,48], index: 11, kind: input, shape index: {}]
  %s12 = inlined_call_operand.vmem [shape: bf16[32,32], index: 12, kind: input, shape index: {}]
  %s13 = inlined_call_operand.vmem [shape: f32[1,32], index: 13, kind: input, shape index: {}]
  %s14 = inlined_call_operand.hbm [shape: f32[2,8,32], index: 14, kind: output, shape index: {}]
  %s15 = sld [smem:[#allocation0]]
  $region93: #{tpu_custom_call.1} parent=0
    _
  %s17 = ssub.s32 1, %s15
  %s18 = scalar_select 0, %s17, %s15
  %s20 = sshll.u32 %s0, 4
  %s21 = int_to_ptr.vmem [resolvable:$true] %s20
  %23 = dma.vmem_to_smem %s21, 16, [#allocation7], [#allocation6]
  %25 = dma.done [#allocation6], 16
  %26 = sfence
  $region1: #{tpu_custom_call.1} parent=0
    #allocation8 [shape = 'u8[8192]{0}', space=vmem, size = 0x2000, scoped, tag = 'output window, operand 0']
    #allocation9 [shape = 's32[2]{0}', space=sflag, size = 0x8, scoped, tag = 'scoped memory for tpu_custom_call.1']
    %27 = vsyncpa [#allocation9], 0
    %s28 = scalar_lea.sflag [#allocation9], 1
    %29 = vsyncpa %s28, 0
    loop: start=0, step=1, limit=6
    $region2: #{tpu_custom_call.1} parent=1 // loop_pre_header
      _
    $region3: #{tpu_custom_call.1} parent=1 // loop_header
      %s31 = sphi 0, %s35
      %p32 = scmp.ge.s32.totalorder %s31, 6
      %s38 = sphi 0, %s57
      %s39 = sphi 0, %s53
      %s40 = sphi 0, %s49
      %s41 = sphi 0, %s38
      %s42 = sphi 0, %s39
      %s43 = sphi 0, %s40
      %s44 = sphi 0, %s41
      %s45 = sphi 0, %s42
      %s46 = sphi 0, %s43
      %s62 = sphi 0, %s64
      %s65 = sphi 0, %s62
      %s66 = sphi 0, %s65
      %s82 = sphi 0, %s66
      %s90 = sphi 0, %s92
      %s93 = sphi 0, %s90
      %s94 = sphi 0, %s93
      %s110 = sphi 0, %s94
      %s118 = sphi 0, %s120
      %s121 = sphi 0, %s118
      %s122 = sphi 0, %s121
      %s138 = sphi 0, %s122
      %s146 = sphi 0, %s148
      %s149 = sphi 0, %s146
      %s150 = sphi 0, %s149
      %s166 = sphi 0, %s150
      %s174 = sphi 0, %s176
      %s177 = sphi 0, %s174
      %s178 = sphi 0, %s177
      %s194 = sphi 0, %s178
      %s200 = sphi 0, %s202
      %s203 = sphi 0, %s200
      %s204 = sphi 0, %s203
      %s220 = sphi 0, %s204
      %s226 = sphi 0, %s228
      %s229 = sphi 0, %s226
      %s230 = sphi 0, %s229
      %s246 = sphi 0, %s230
      %s250 = sphi 0, %s250
      %s252 = sphi 0, %s250
      %s253 = sphi 0, %s252
      %s267 = sphi 0, %s253
      %s271 = sphi 0, %s271
      %s273 = sphi 0, %s271
      %s274 = sphi 0, %s273
      %s288 = sphi 0, %s274
      %s292 = sphi 0, %s292
      %s294 = sphi 0, %s292
      %s295 = sphi 0, %s294
      %s309 = sphi 0, %s295
      %s313 = sphi 0, %s313
      %s315 = sphi 0, %s313
      %s316 = sphi 0, %s315
      %s330 = sphi 0, %s316
      %s334 = sphi 0, %s334
      %s336 = sphi 0, %s334
      %s337 = sphi 0, %s336
      %s351 = sphi 0, %s337
      %s355 = sphi 0, %s355
      %s357 = sphi 0, %s355
      %s358 = sphi 0, %s357
      %s372 = sphi 0, %s358
      %s380 = sphi 0, %s382
      %s383 = sphi 0, %s380
      %s384 = sphi 0, %s383
      %s400 = sphi 0, %s384
    $region4: #{tpu_custom_call.1} parent=1 // loop_header_branch
      %34 = sbr.rel (%p32) target = $region8
    $region5: #{tpu_custom_call.1} parent=1 // loop_body
      %s36 = ssub.s32 %s31, 1
      %s37 = ssub.s32 %s31, 2
      %s47 = sadd.s32 1, %s40
      %p48 = scmp.ge.s32.totalorder %s47, 2
      %s49 = scalar_select %p48, 0, %s47
      %s50 = sadd.s32 1, %s39
      %s51 = scalar_select %p48, %s50, %s39
      %p52 = scmp.ge.s32.totalorder %s51, 1
      %s53 = scalar_select %p52, 0, %s51
      %s54 = sadd.s32 1, %s38
      %s55 = scalar_select %p52, %s54, %s38
      %p56 = scmp.ge.s32.totalorder %s55, 2
      %s57 = scalar_select %p56, 0, %s55
      %s58 = ssub.s32 %s38, %s57
      %s59 = ssub.s32 %s39, %s53
      %s60 = sor.u32 %s58, %s59
      %p61 = scmp.eq.s32.totalorder %s60, 0
      %s63 = sadd.s32 %s62, 1
      %s64 = scalar_select %p61, %s62, %s63
      %p67 = pneg %p61
      %p68 = scmp.eq.s32.totalorder %s31, 3
      %p69 = por %p67, %p68
      %p70 = scmp.ne.s32.totalorder %s62, %s65
      %p71 = scmp.eq.s32.totalorder %s31, 0
      %p72 = por %p70, %p71
      %p73 = scmp.ne.s32.totalorder %s62, %s65
      %p74 = scmp.eq.s32.totalorder %s36, 3
      %p75 = por %p73, %p74
      %p76 = scmp.ne.s32.totalorder %s65, %s66
      %p77 = scmp.eq.s32.totalorder %s36, 0
      %p78 = por %p76, %p77
      %p79 = scmp.ne.s32.totalorder %s65, %s66
      %p80 = scmp.eq.s32.totalorder %s37, 3
      %p81 = por %p79, %p80
      %p83 = scmp.ne.s32.totalorder %s66, %s82
      %p84 = scmp.eq.s32.totalorder %s37, 0
      %p85 = por %p83, %p84
      %s86 = ssub.s32 %s38, %s57
      %s87 = ssub.s32 %s39, %s53
      %s88 = sor.u32 %s86, %s87
      %p89 = scmp.eq.s32.totalorder %s88, 0
      %s91 = sadd.s32 %s90, 1
      %s92 = scalar_select %p89, %s90, %s91
      %p95 = pneg %p89
      %p96 = scmp.eq.s32.totalorder %s31, 3
      %p97 = por %p95, %p96
      %p98 = scmp.ne.s32.totalorder %s90, %s93
      %p99 = scmp.eq.s32.totalorder %s31, 0
      %p100 = por %p98, %p99
      %p101 = scmp.ne.s32.totalorder %s90, %s93
      %p102 = scmp.eq.s32.totalorder %s36, 3
      %p103 = por %p101, %p102
      %p104 = scmp.ne.s32.totalorder %s93, %s94
      %p105 = scmp.eq.s32.totalorder %s36, 0
      %p106 = por %p104, %p105
      %p107 = scmp.ne.s32.totalorder %s93, %s94
      %p108 = scmp.eq.s32.totalorder %s37, 3
      %p109 = por %p107, %p108
      %p111 = scmp.ne.s32.totalorder %s94, %s110
      %p112 = scmp.eq.s32.totalorder %s37, 0
      %p113 = por %p111, %p112
      %s114 = ssub.s32 %s38, %s57
      %s115 = ssub.s32 %s39, %s53
      %s116 = sor.u32 %s114, %s115
      %p117 = scmp.eq.s32.totalorder %s116, 0
      %s119 = sadd.s32 %s118, 1
      %s120 = scalar_select %p117, %s118, %s119
      %p123 = pneg %p117
      %p124 = scmp.eq.s32.totalorder %s31, 3
      %p125 = por %p123, %p124
      %p126 = scmp.ne.s32.totalorder %s118, %s121
      %p127 = scmp.eq.s32.totalorder %s31, 0
      %p128 = por %p126, %p127
      %p129 = scmp.ne.s32.totalorder %s118, %s121
      %p130 = scmp.eq.s32.totalorder %s36, 3
      %p131 = por %p129, %p130
      %p132 = scmp.ne.s32.totalorder %s121, %s122
      %p133 = scmp.eq.s32.totalorder %s36, 0
      %p134 = por %p132, %p133
      %p135 = scmp.ne.s32.totalorder %s121, %s122
      %p136 = scmp.eq.s32.totalorder %s37, 3
      %p137 = por %p135, %p136
      %p139 = scmp.ne.s32.totalorder %s122, %s138
      %p140 = scmp.eq.s32.totalorder %s37, 0
      %p141 = por %p139, %p140
      %s142 = ssub.s32 %s38, %s57
      %s143 = ssub.s32 %s40, %s49
      %s144 = sor.u32 %s142, %s143
      %p145 = scmp.eq.s32.totalorder %s144, 0
      %s147 = sadd.s32 %s146, 1
      %s148 = scalar_select %p145, %s146, %s147
      %p151 = pneg %p145
      %p152 = scmp.eq.s32.totalorder %s31, 3
      %p153 = por %p151, %p152
      %p154 = scmp.ne.s32.totalorder %s146, %s149
      %p155 = scmp.eq.s32.totalorder %s31, 0
      %p156 = por %p154, %p155
      %p157 = scmp.ne.s32.totalorder %s146, %s149
      %p158 = scmp.eq.s32.totalorder %s36, 3
      %p159 = por %p157, %p158
      %p160 = scmp.ne.s32.totalorder %s149, %s150
      %p161 = scmp.eq.s32.totalorder %s36, 0
      %p162 = por %p160, %p161
      %p163 = scmp.ne.s32.totalorder %s149, %s150
      %p164 = scmp.eq.s32.totalorder %s37, 3
      %p165 = por %p163, %p164
      %p167 = scmp.ne.s32.totalorder %s150, %s166
      %p168 = scmp.eq.s32.totalorder %s37, 0
      %p169 = por %p167, %p168
      %s170 = ssub.s32 %s38, %s57
      %s171 = ssub.s32 %s40, %s49
      %s172 = sor.u32 %s170, %s171
      %p173 = scmp.eq.s32.totalorder %s172, 0
      %s175 = sadd.s32 %s174, 1
      %s176 = scalar_select %p173, %s174, %s175
      %p179 = pneg %p173
      %p180 = scmp.eq.s32.totalorder %s31, 3
      %p181 = por %p179, %p180
      %p182 = scmp.ne.s32.totalorder %s174, %s177
      %p183 = scmp.eq.s32.totalorder %s31, 0
      %p184 = por %p182, %p183
      %p185 = scmp.ne.s32.totalorder %s174, %s177
      %p186 = scmp.eq.s32.totalorder %s36, 3
      %p187 = por %p185, %p186
      %p188 = scmp.ne.s32.totalorder %s177, %s178
      %p189 = scmp.eq.s32.totalorder %s36, 0
      %p190 = por %p188, %p189
      %p191 = scmp.ne.s32.totalorder %s177, %s178
      %p192 = scmp.eq.s32.totalorder %s37, 3
      %p193 = por %p191, %p192
      %p195 = scmp.ne.s32.totalorder %s178, %s194
      %p196 = scmp.eq.s32.totalorder %s37, 0
      %p197 = por %p195, %p196
      %s198 = ssub.s32 %s40, %s49
      %p199 = scmp.eq.s32.totalorder %s198, 0
      %s201 = sadd.s32 %s200, 1
      %s202 = scalar_select %p199, %s200, %s201
      %p205 = pneg %p199
      %p206 = scmp.eq.s32.totalorder %s31, 3
      %p207 = por %p205, %p206
      %p208 = scmp.ne.s32.totalorder %s200, %s203
      %p209 = scmp.eq.s32.totalorder %s31, 0
      %p210 = por %p208, %p209
      %p211 = scmp.ne.s32.totalorder %s200, %s203
      %p212 = scmp.eq.s32.totalorder %s36, 3
      %p213 = por %p211, %p212
      %p214 = scmp.ne.s32.totalorder %s203, %s204
      %p215 = scmp.eq.s32.totalorder %s36, 0
      %p216 = por %p214, %p215
      %p217 = scmp.ne.s32.totalorder %s203, %s204
      %p218 = scmp.eq.s32.totalorder %s37, 3
      %p219 = por %p217, %p218
      %p221 = scmp.ne.s32.totalorder %s204, %s220
      %p222 = scmp.eq.s32.totalorder %s37, 0
      %p223 = por %p221, %p222
      %s224 = ssub.s32 %s40, %s49
      %p225 = scmp.eq.s32.totalorder %s224, 0
      %s227 = sadd.s32 %s226, 1
      %s228 = scalar_select %p225, %s226, %s227
      %p231 = pneg %p225
      %p232 = scmp.eq.s32.totalorder %s31, 3
      %p233 = por %p231, %p232
      %p234 = scmp.ne.s32.totalorder %s226, %s229
      %p235 = scmp.eq.s32.totalorder %s31, 0
      %p236 = por %p234, %p235
      %p237 = scmp.ne.s32.totalorder %s226, %s229
      %p238 = scmp.eq.s32.totalorder %s36, 3
      %p239 = por %p237, %p238
      %p240 = scmp.ne.s32.totalorder %s229, %s230
      %p241 = scmp.eq.s32.totalorder %s36, 0
      %p242 = por %p240, %p241
      %p243 = scmp.ne.s32.totalorder %s229, %s230
      %p244 = scmp.eq.s32.totalorder %s37, 3
      %p245 = por %p243, %p244
      %p247 = scmp.ne.s32.totalorder %s230, %s246
      %p248 = scmp.eq.s32.totalorder %s37, 0
      %p249 = por %p247, %p248
      %s251 = sadd.s32 %s250, 1
      %p254 = scmp.eq.s32.totalorder %s31, 3
      %p255 = scmp.ne.s32.totalorder %s250, %s252
      %p256 = scmp.eq.s32.totalorder %s31, 0
      %p257 = por %p255, %p256
      %p258 = scmp.ne.s32.totalorder %s250, %s252
      %p259 = scmp.eq.s32.totalorder %s36, 3
      %p260 = por %p258, %p259
      %p261 = scmp.ne.s32.totalorder %s252, %s253
      %p262 = scmp.eq.s32.totalorder %s36, 0
      %p263 = por %p261, %p262
      %p264 = scmp.ne.s32.totalorder %s252, %s253
      %p265 = scmp.eq.s32.totalorder %s37, 3
      %p266 = por %p264, %p265
      %p268 = scmp.ne.s32.totalorder %s253, %s267
      %p269 = scmp.eq.s32.totalorder %s37, 0
      %p270 = por %p268, %p269
      %s272 = sadd.s32 %s271, 1
      %p275 = scmp.eq.s32.totalorder %s31, 3
      %p276 = scmp.ne.s32.totalorder %s271, %s273
      %p277 = scmp.eq.s32.totalorder %s31, 0
      %p278 = por %p276, %p277
      %p279 = scmp.ne.s32.totalorder %s271, %s273
      %p280 = scmp.eq.s32.totalorder %s36, 3
      %p281 = por %p279, %p280
      %p282 = scmp.ne.s32.totalorder %s273, %s274
      %p283 = scmp.eq.s32.totalorder %s36, 0
      %p284 = por %p282, %p283
      %p285 = scmp.ne.s32.totalorder %s273, %s274
      %p286 = scmp.eq.s32.totalorder %s37, 3
      %p287 = por %p285, %p286
      %p289 = scmp.ne.s32.totalorder %s274, %s288
      %p290 = scmp.eq.s32.totalorder %s37, 0
      %p291 = por %p289, %p290
      %s293 = sadd.s32 %s292, 1
      %p296 = scmp.eq.s32.totalorder %s31, 3
      %p297 = scmp.ne.s32.totalorder %s292, %s294
      %p298 = scmp.eq.s32.totalorder %s31, 0
      %p299 = por %p297, %p298
      %p300 = scmp.ne.s32.totalorder %s292, %s294
      %p301 = scmp.eq.s32.totalorder %s36, 3
      %p302 = por %p300, %p301
      %p303 = scmp.ne.s32.totalorder %s294, %s295
      %p304 = scmp.eq.s32.totalorder %s36, 0
      %p305 = por %p303, %p304
      %p306 = scmp.ne.s32.totalorder %s294, %s295
      %p307 = scmp.eq.s32.totalorder %s37, 3
      %p308 = por %p306, %p307
      %p310 = scmp.ne.s32.totalorder %s295, %s309
      %p311 = scmp.eq.s32.totalorder %s37, 0
      %p312 = por %p310, %p311
      %s314 = sadd.s32 %s313, 1
      %p317 = scmp.eq.s32.totalorder %s31, 3
      %p318 = scmp.ne.s32.totalorder %s313, %s315
      %p319 = scmp.eq.s32.totalorder %s31, 0
      %p320 = por %p318, %p319
      %p321 = scmp.ne.s32.totalorder %s313, %s315
      %p322 = scmp.eq.s32.totalorder %s36, 3
      %p323 = por %p321, %p322
      %p324 = scmp.ne.s32.totalorder %s315, %s316
      %p325 = scmp.eq.s32.totalorder %s36, 0
      %p326 = por %p324, %p325
      %p327 = scmp.ne.s32.totalorder %s315, %s316
      %p328 = scmp.eq.s32.totalorder %s37, 3
      %p329 = por %p327, %p328
      %p331 = scmp.ne.s32.totalorder %s316, %s330
      %p332 = scmp.eq.s32.totalorder %s37, 0
      %p333 = por %p331, %p332
      %s335 = sadd.s32 %s334, 1
      %p338 = scmp.eq.s32.totalorder %s31, 3
      %p339 = scmp.ne.s32.totalorder %s334, %s336
      %p340 = scmp.eq.s32.totalorder %s31, 0
      %p341 = por %p339, %p340
      %p342 = scmp.ne.s32.totalorder %s334, %s336
      %p343 = scmp.eq.s32.totalorder %s36, 3
      %p344 = por %p342, %p343
      %p345 = scmp.ne.s32.totalorder %s336, %s337
      %p346 = scmp.eq.s32.totalorder %s36, 0
      %p347 = por %p345, %p346
      %p348 = scmp.ne.s32.totalorder %s336, %s337
      %p349 = scmp.eq.s32.totalorder %s37, 3
      %p350 = por %p348, %p349
      %p352 = scmp.ne.s32.totalorder %s337, %s351
      %p353 = scmp.eq.s32.totalorder %s37, 0
      %p354 = por %p352, %p353
      %s356 = sadd.s32 %s355, 1
      %p359 = scmp.eq.s32.totalorder %s31, 3
      %p360 = scmp.ne.s32.totalorder %s355, %s357
      %p361 = scmp.eq.s32.totalorder %s31, 0
      %p362 = por %p360, %p361
      %p363 = scmp.ne.s32.totalorder %s355, %s357
      %p364 = scmp.eq.s32.totalorder %s36, 3
      %p365 = por %p363, %p364
      %p366 = scmp.ne.s32.totalorder %s357, %s358
      %p367 = scmp.eq.s32.totalorder %s36, 0
      %p368 = por %p366, %p367
      %p369 = scmp.ne.s32.totalorder %s357, %s358
      %p370 = scmp.eq.s32.totalorder %s37, 3
      %p371 = por %p369, %p370
      %p373 = scmp.ne.s32.totalorder %s358, %s372
      %p374 = scmp.eq.s32.totalorder %s37, 0
      %p375 = por %p373, %p374
      %s376 = ssub.s32 %s38, %s57
      %s377 = ssub.s32 %s39, %s53
      %s378 = sor.u32 %s376, %s377
      %p379 = scmp.eq.s32.totalorder %s378, 0
      %s381 = sadd.s32 %s380, 1
      %s382 = scalar_select %p379, %s380, %s381
      %p385 = pneg %p379
      %p386 = scmp.eq.s32.totalorder %s31, 3
      %p387 = por %p385, %p386
      %p388 = scmp.ne.s32.totalorder %s380, %s383
      %p389 = scmp.eq.s32.totalorder %s31, 0
      %p390 = por %p388, %p389
      %p391 = scmp.ne.s32.totalorder %s380, %s383
      %p392 = scmp.eq.s32.totalorder %s36, 3
      %p393 = por %p391, %p392
      %p394 = scmp.ne.s32.totalorder %s383, %s384
      %p395 = scmp.eq.s32.totalorder %s36, 0
      %p396 = por %p394, %p395
      %p397 = scmp.ne.s32.totalorder %s383, %s384
      %p398 = scmp.eq.s32.totalorder %s37, 3
      %p399 = por %p397, %p398
      %p401 = scmp.ne.s32.totalorder %s384, %s400
      %p402 = scmp.eq.s32.totalorder %s37, 0
      %p403 = por %p401, %p402
      %p404 = scmp.le.s32.totalorder 1, %s31
      %p405 = scmp.lt.s32.totalorder %s31, 5
      %p406 = pnand %p404, %p405
      %p407 = pneg %p406
      // Predicated region
      $region9: #{tpu_custom_call.1} parent=5 // pred_check
        _
      $region10: #{tpu_custom_call.1} parent=5 // pred_check_branch
        %409 = sbr.rel (%p406) target = $region12
      $region11: #{tpu_custom_call.1} parent=5 // pred_region
        %s410 = ssub.s32 %s31, 1
        // Predicated region
        $region13: #{tpu_custom_call.1} parent=11 // pred_check
          %p411 = pneg %p263
        $region14: #{tpu_custom_call.1} parent=11 // pred_check_branch
          %413 = sbr.rel (%p411) target = $region16
        $region15: #{tpu_custom_call.1} parent=11 // pred_region
          _
        $region16: #{tpu_custom_call.1} parent=11 // pred_fallthru
          _
        // Predicated region
        $region17: #{tpu_custom_call.1} parent=11 // pred_check
          %p414 = pneg %p284
        $region18: #{tpu_custom_call.1} parent=11 // pred_check_branch
          %416 = sbr.rel (%p414) target = $region20
        $region19: #{tpu_custom_call.1} parent=11 // pred_region
          _
        $region20: #{tpu_custom_call.1} parent=11 // pred_fallthru
          _
        // Predicated region
        $region21: #{tpu_custom_call.1} parent=11 // pred_check
          %p417 = pneg %p305
        $region22: #{tpu_custom_call.1} parent=11 // pred_check_branch
          %419 = sbr.rel (%p417) target = $region24
        $region23: #{tpu_custom_call.1} parent=11 // pred_region
          _
        $region24: #{tpu_custom_call.1} parent=11 // pred_fallthru
          _
        // Predicated region
        $region25: #{tpu_custom_call.1} parent=11 // pred_check
          %p420 = pneg %p326
        $region26: #{tpu_custom_call.1} parent=11 // pred_check_branch
          %422 = sbr.rel (%p420) target = $region28
        $region27: #{tpu_custom_call.1} parent=11 // pred_region
          _
        $region28: #{tpu_custom_call.1} parent=11 // pred_fallthru
          _
        // Predicated region
        $region29: #{tpu_custom_call.1} parent=11 // pred_check
          %p423 = pneg %p347
        $region30: #{tpu_custom_call.1} parent=11 // pred_check_branch
          %425 = sbr.rel (%p423) target = $region32
        $region31: #{tpu_custom_call.1} parent=11 // pred_region
          _
        $region32: #{tpu_custom_call.1} parent=11 // pred_fallthru
          _
        // Predicated region
        $region33: #{tpu_custom_call.1} parent=11 // pred_check
          %p426 = pneg %p368
        $region34: #{tpu_custom_call.1} parent=11 // pred_check_branch
          %428 = sbr.rel (%p426) target = $region36
        $region35: #{tpu_custom_call.1} parent=11 // pred_region
          _
        $region36: #{tpu_custom_call.1} parent=11 // pred_fallthru
          _
      $region12: #{tpu_custom_call.1} parent=5 // pred_fallthru
        _
      %p429 = scmp.lt.s32.totalorder %s31, 4
      // Predicated region
      $region37: #{tpu_custom_call.1} parent=5 // pred_check
        %p430 = pneg %p429
      $region38: #{tpu_custom_call.1} parent=5 // pred_check_branch
        %432 = sbr.rel (%p430) target = $region40
      $region39: #{tpu_custom_call.1} parent=5 // pred_region
        // Predicated region
        $region41: #{tpu_custom_call.1} parent=39 // pred_check
          %p433 = pneg %p72
        $region42: #{tpu_custom_call.1} parent=39 // pred_check_branch
          %435 = sbr.rel (%p433) target = $region44
        $region43: #{tpu_custom_call.1} parent=39 // pred_region
          %p436 = scmp.lt.s32.totalorder %s38, 1
          %s437 = scalar_select %p436, %s38, 1
          %p438 = scmp.lt.s32.totalorder %s39, 0
          %s439 = scalar_select %p438, %s39, 0
          %s440 = sadd.s32 %s439, %s437
          %s441 = smul.addr %s440, 8
          %s442 = scalar_lea.vmem %s1, %s441
        $region44: #{tpu_custom_call.1} parent=39 // pred_fallthru
          _
        // Predicated region
        $region45: #{tpu_custom_call.1} parent=39 // pred_check
          %p443 = pneg %p100
        $region46: #{tpu_custom_call.1} parent=39 // pred_check_branch
          %445 = sbr.rel (%p443) target = $region48
        $region47: #{tpu_custom_call.1} parent=39 // pred_region
          %p446 = scmp.lt.s32.totalorder %s38, 1
          %s447 = scalar_select %p446, %s38, 1
          %p448 = scmp.lt.s32.totalorder %s39, 0
          %s449 = scalar_select %p448, %s39, 0
          %s450 = sadd.s32 %s449, %s447
          %s451 = smul.addr %s450, 8
          %s452 = scalar_lea.vmem %s2, %s451
        $region48: #{tpu_custom_call.1} parent=39 // pred_fallthru
          _
        // Predicated region
        $region49: #{tpu_custom_call.1} parent=39 // pred_check
          %p453 = pneg %p128
        $region50: #{tpu_custom_call.1} parent=39 // pred_check_branch
          %455 = sbr.rel (%p453) target = $region52
        $region51: #{tpu_custom_call.1} parent=39 // pred_region
          %p456 = scmp.lt.s32.totalorder %s38, 1
          %s457 = scalar_select %p456, %s38, 1
          %p458 = scmp.lt.s32.totalorder %s39, 0
          %s459 = scalar_select %p458, %s39, 0
          %s460 = sadd.s32 %s459, %s457
          %s461 = smul.addr %s460, 8
          %s462 = scalar_lea.vmem %s3, %s461
        $region52: #{tpu_custom_call.1} parent=39 // pred_fallthru
          _
        // Predicated region
        $region53: #{tpu_custom_call.1} parent=39 // pred_check
          %p463 = pneg %p156
        $region54: #{tpu_custom_call.1} parent=39 // pred_check_branch
          %465 = sbr.rel (%p463) target = $region56
        $region55: #{tpu_custom_call.1} parent=39 // pred_region
          %s466 = smul.u32 16, %s40
          %p467 = scmp.lt.s32.totalorder %s38, 1
          %s468 = scalar_select %p467, %s38, 1
          %p469 = scmp.lt.s32.totalorder %s466, 31
          %s470 = scalar_select %p469, %s466, 31
          %s471 = smul.addr %s468, 32
          %s472 = sadd.s32 %s470, %s471
          %s473 = smul.addr %s472, 4
          %s474 = scalar_lea.vmem %s4, %s473
          %s475 = smul.u32 16, %s40
        $region56: #{tpu_custom_call.1} parent=39 // pred_fallthru
          _
        // Predicated region
        $region57: #{tpu_custom_call.1} parent=39 // pred_check
          %p476 = pneg %p184
        $region58: #{tpu_custom_call.1} parent=39 // pred_check_branch
          %478 = sbr.rel (%p476) target = $region60
        $region59: #{tpu_custom_call.1} parent=39 // pred_region
          %p479 = scmp.lt.s32.totalorder %s38, 1
          %s480 = scalar_select %p479, %s38, 1
          %p481 = scmp.lt.s32.totalorder %s40, 1
          %s482 = scalar_select %p481, %s40, 1
          %s483 = smul.addr %s480, 2
          %s484 = sadd.s32 %s482, %s483
          %s485 = scalar_lea.vmem %s5, %s484
        $region60: #{tpu_custom_call.1} parent=39 // pred_fallthru
          _
        // Predicated region
        $region61: #{tpu_custom_call.1} parent=39 // pred_check
          %p486 = pneg %p210
        $region62: #{tpu_custom_call.1} parent=39 // pred_check_branch
          %488 = sbr.rel (%p486) target = $region64
        $region63: #{tpu_custom_call.1} parent=39 // pred_region
          %p489 = scmp.lt.s32.totalorder %s40, 1
          %s490 = scalar_select %p489, %s40, 1
          %s491 = scalar_lea.vmem %s6, %s490
        $region64: #{tpu_custom_call.1} parent=39 // pred_fallthru
          _
        // Predicated region
        $region65: #{tpu_custom_call.1} parent=39 // pred_check
          %p492 = pneg %p236
        $region66: #{tpu_custom_call.1} parent=39 // pred_check_branch
          %494 = sbr.rel (%p492) target = $region68
        $region67: #{tpu_custom_call.1} parent=39 // pred_region
          %p495 = scmp.lt.s32.totalorder %s40, 1
          %s496 = scalar_select %p495, %s40, 1
          %s497 = scalar_lea.vmem %s7, %s496
        $region68: #{tpu_custom_call.1} parent=39 // pred_fallthru
          _
      $region40: #{tpu_custom_call.1} parent=5 // pred_fallthru
        _
      %p498 = scmp.le.s32.totalorder 1, %s31
      %p499 = scmp.lt.s32.totalorder %s31, 5
      %p500 = pnand %p498, %p499
      %p501 = pneg %p500
      // Predicated region
      $region69: #{tpu_custom_call.1} parent=5 // pred_check
        _
      $region70: #{tpu_custom_call.1} parent=5 // pred_check_branch
        %503 = sbr.rel (%p500) target = $region72
      $region71: #{tpu_custom_call.1} parent=5 // pred_region
        %s504 = ssub.s32 %s31, 1
        %p505 = scmp.lt.s32.totalorder %s41, 1
        %s506 = scalar_select %p505, %s41, 1
        %p507 = scmp.lt.s32.totalorder %s42, 0
        %s508 = scalar_select %p507, %s42, 0
        %s509 = sadd.s32 %s508, %s506
        %s510 = smul.addr %s509, 8
        %s511 = scalar_lea.vmem %s1, %s510
        %p512 = pneg %p78
        %p513 = pneg %p75
        %p514 = scmp.lt.s32.totalorder %s41, 1
        %s515 = scalar_select %p514, %s41, 1
        %p516 = scmp.lt.s32.totalorder %s42, 0
        %s517 = scalar_select %p516, %s42, 0
        %s518 = sadd.s32 %s517, %s515
        %s519 = smul.addr %s518, 8
        %s520 = scalar_lea.vmem %s2, %s519
        %p521 = pneg %p106
        %p522 = pneg %p103
        %p523 = scmp.lt.s32.totalorder %s41, 1
        %s524 = scalar_select %p523, %s41, 1
        %p525 = scmp.lt.s32.totalorder %s42, 0
        %s526 = scalar_select %p525, %s42, 0
        %s527 = sadd.s32 %s526, %s524
        %s528 = smul.addr %s527, 8
        %s529 = scalar_lea.vmem %s3, %s528
        %p530 = pneg %p134
        %p531 = pneg %p131
        %s532 = smul.u32 16, %s43
        %p533 = scmp.lt.s32.totalorder %s41, 1
        %s534 = scalar_select %p533, %s41, 1
        %p535 = scmp.lt.s32.totalorder %s532, 31
        %s536 = scalar_select %p535, %s532, 31
        %s537 = smul.addr %s534, 32
        %s538 = sadd.s32 %s536, %s537
        %s539 = smul.addr %s538, 4
        %s540 = scalar_lea.vmem %s4, %s539
        %p541 = pneg %p162
        %p542 = pneg %p159
        %p543 = scmp.lt.s32.totalorder %s41, 1
        %s544 = scalar_select %p543, %s41, 1
        %p545 = scmp.lt.s32.totalorder %s43, 1
        %s546 = scalar_select %p545, %s43, 1
        %s547 = smul.addr %s544, 2
        %s548 = sadd.s32 %s546, %s547
        %s549 = scalar_lea.vmem %s5, %s548
        %p550 = pneg %p190
        %p551 = pneg %p187
        %p552 = scmp.lt.s32.totalorder %s43, 1
        %s553 = scalar_select %p552, %s43, 1
        %s554 = scalar_lea.vmem %s6, %s553
        %p555 = pneg %p216
        %p556 = pneg %p213
        %p557 = scmp.lt.s32.totalorder %s43, 1
        %s558 = scalar_select %p557, %s43, 1
        %s559 = scalar_lea.vmem %s7, %s558
        %p560 = pneg %p242
        %p561 = pneg %p239
        %p562 = pneg %p263
        %p563 = pneg %p260
        %p564 = pneg %p284
        %p565 = pneg %p281
        %p566 = pneg %p305
        %p567 = pneg %p302
        %p568 = pneg %p326
        %p569 = pneg %p323
        %p570 = pneg %p347
        %p571 = pneg %p344
        %p572 = pneg %p368
        %p573 = pneg %p365
        %p574 = pneg %p396
        %p575 = pneg %p393
        %s576 = sand.u32 %s383, 1
        %s577 = scalar_lea.sflag [#allocation9], %s576
        %s578 = sand.u32 %s383, 1
        %s579 = smul.addr %s578, 8
        %s580 = scalar_lea.vmem [#allocation8], %s579
        %p581 = scmp.lt.s32.totalorder %s41, 1
        %s582 = scalar_select %p581, %s41, 1
        %p583 = scmp.lt.s32.totalorder %s42, 0
        %s584 = scalar_select %p583, %s42, 0
        %s585 = sadd.s32 %s584, %s582
        %s586 = smul.addr %s585, 8
        %s587 = scalar_lea.vmem %s1, %s586
        %p588 = scmp.lt.s32.totalorder %s41, 1
        %s589 = scalar_select %p588, %s41, 1
        %p590 = scmp.lt.s32.totalorder %s42, 0
        %s591 = scalar_select %p590, %s42, 0
        %s592 = sadd.s32 %s591, %s589
        %s593 = smul.addr %s592, 8
        %s594 = scalar_lea.vmem %s2, %s593
        %p595 = scmp.lt.s32.totalorder %s41, 1
        %s596 = scalar_select %p595, %s41, 1
        %p597 = scmp.lt.s32.totalorder %s42, 0
        %s598 = scalar_select %p597, %s42, 0
        %s599 = sadd.s32 %s598, %s596
        %s600 = smul.addr %s599, 8
        %s601 = scalar_lea.vmem %s3, %s600
        %s602 = smul.u32 16, %s43
        %p603 = scmp.lt.s32.totalorder %s41, 1
        %s604 = scalar_select %p603, %s41, 1
        %p605 = scmp.lt.s32.totalorder %s602, 31
        %s606 = scalar_select %p605, %s602, 31
        %s607 = smul.addr %s604, 32
        %s608 = sadd.s32 %s606, %s607
        %s609 = smul.addr %s608, 4
        %s610 = scalar_lea.vmem %s4, %s609
        %s611 = smul.u32 16, %s43
        %p612 = scmp.lt.s32.totalorder %s41, 1
        %s613 = scalar_select %p612, %s41, 1
        %p614 = scmp.lt.s32.totalorder %s43, 1
        %s615 = scalar_select %p614, %s43, 1
        %s616 = smul.addr %s613, 2
        %s617 = sadd.s32 %s615, %s616
        %s618 = scalar_lea.vmem %s5, %s617
        %p619 = scmp.lt.s32.totalorder %s43, 1
        %s620 = scalar_select %p619, %s43, 1
        %s621 = scalar_lea.vmem %s6, %s620
        %p622 = scmp.lt.s32.totalorder %s43, 1
        %s623 = scalar_select %p622, %s43, 1
        %s624 = scalar_lea.vmem %s7, %s623
        %p626 = scmp.eq.s32.totalorder %s43, 0
        // Predicated region
        $region73: #{tpu_custom_call.1} parent=71 // pred_check
          %p627 = pneg %p626
        $region74: #{tpu_custom_call.1} parent=71 // pred_check_branch
          %629 = sbr.rel (%p627) target = $region76
        $region75: #{tpu_custom_call.1} parent=71 // pred_region
          %v630 = vld [vmem:[%s587] sm:$0xff]
          %v631 = vpack.c.bf16 %v630, %v630
          %v632 = vld [vmem:[%s10] sm:$0xf]
          %v633 = vld [vmem:[%s10 + $0x4] sm:$0xf]
          %v634 = vld [vmem:[%s10 + $0x8] sm:$0xf]
          %v635 = vld [vmem:[%s10 + $0xc] sm:$0xf]
          %v636 = vld [vmem:[%s11] sm:$0x1]
          %v638 = vperm.slane %v636, 0
          %v644 = vunpack.c.l.b16 %v632
          %v645 = vunpack.c.l.b16 %v633
          %v646 = vunpack.c.l.b16 %v634
          %v647 = vunpack.c.l.b16 %v635
          %v648 = vpack.c.b16 %v645, %v644
          %v649 = vpack.c.b16 %v647, %v646
          %vm652 = vcmask 261120
          %v654 = vsel %vm652, %v631, 0
          %656 = vmatpush.bf16.msra.mxu0 0
          %657 = vmatpush.bf16.msra.mxu0 0
          %658 = vmatpush.bf16.msra.mxu0 0
          %659 = vmatpush.bf16.msra.mxu0 0
          %660 = vmatpush.bf16.msra.mxu0 0
          %661 = vmatpush.bf16.msra.mxu0 0
          %662 = vmatpush.bf16.msra.mxu0 %v649
          %663 = vmatpush.bf16.msra.mxu0 %v648
          %664 = vmatmul.bf16.gmra.mxu0 %v654
          %v665 = vpop.f32.mrf.mxu0
          %v666 = vadd.f32 %v638, %v665
          %v667 = vpop.f32.mrf.mxu0
          %668 = vdwg.mxu0
          %v669 = vld [vmem:[%s594] sm:$0xff]
          %v670 = vmul.f32 %v669, 8.0
          %v671 = vsub.f32 %v670, 0.5
          %673 = vset.pattern.permute.xlu0 0
          %674 = vperm.xlu0 %673, %v671
          %v675 = vpop.permute.xlu0 %674
          %v677 = vadd.f32 %v675, %v666
          %678 = vset.pattern.permute.xlu0 1
          %679 = vperm.xlu0 %678, %v671
          %v680 = vpop.permute.xlu0 %679
          %v682 = vadd.f32 %v680, %v666
          %vm683 = vcmask 64512
          %684 = vst.msk [vmem:[#allocation2] sm:$0xff] %vm683, %v677
          %686 = vrot.lane.b32.xlu0 %v682, 120
          %v687 = vpop.permute.xlu0 %686
          %689 = vst.msk [vmem:[#allocation3] sm:$0xff] %vm683, %v687
          %v690 = vmul.f32 %v669, 4.0
          %v691 = vsub.f32 %v690, 0.5
          %693 = vset.pattern.permute.xlu0 2
          %694 = vperm.xlu0 %693, %v691
          %v695 = vpop.permute.xlu0 %694
          %v697 = vadd.f32 %v695, %v666
          %698 = vset.pattern.permute.xlu0 3
          %699 = vperm.xlu0 %698, %v691
          %v700 = vpop.permute.xlu0 %699
          %v702 = vadd.f32 %v700, %v666
          %704 = vrot.lane.b32.xlu0 %v697, 112
          %v705 = vpop.permute.xlu0 %704
          %s707 = scalar_lea.vmem [#allocation2], 8
          %708 = vst.msk [vmem:[%s707] sm:$0xff] %vm683, %v705
          %710 = vrot.lane.b32.xlu0 %v702, 104
          %v711 = vpop.permute.xlu0 %710
          %s713 = scalar_lea.vmem [#allocation3], 8
          %714 = vst.msk [vmem:[%s713] sm:$0xff] %vm683, %v711
          %vm715 = vcmask 294144
          %v716 = vsel %vm715, %v666, -inf
          %717 = vmax.xlane.f32.xlu0 %v716
          %v718 = vpop.xlane.xlu0 %717
          %v719 = vsub.f32 %v666, %v718
          %v720 = vmul.f32 %v719, 1.442695
          %v721 = vpow.pop %v720
          %723 = vrot.lane.b32.xlu0 %v721, 96
          %v724 = vpop.permute.xlu0 %723
          %vm726 = vcmask 31744
          %v727 = vsel %vm726, %v724, 0.0
          %728 = vadd.xlane.f32.xlu0 %v727
          %v729 = vpop.xlane.xlu0 %728
          %v730 = vrcp.pop %v729
          %v731 = vmul.f32 %v721, %v730
          %vm732 = vcmask 326944
          %v733 = vsel %vm732, %v666, -inf
          %734 = vmax.xlane.f32.xlu0 %v733
          %v735 = vpop.xlane.xlu0 %734
          %v736 = vsub.f32 %v666, %v735
          %v737 = vmul.f32 %v736, 1.442695
          %v738 = vpow.pop %v737
          %740 = vrot.lane.b32.xlu0 %v738, 92
          %v741 = vpop.permute.xlu0 %740
          %v743 = vsel %vm726, %v741, 0.0
          %744 = vadd.xlane.f32.xlu0 %v743
          %v745 = vpop.xlane.xlu0 %744
          %v746 = vrcp.pop %v745
          %v747 = vmul.f32 %v738, %v746
          %vm748 = vcmask 359744
          %v749 = vsel %vm748, %v666, -inf
          %750 = vmax.xlane.f32.xlu0 %v749
          %v751 = vpop.xlane.xlu0 %750
          %v752 = vsub.f32 %v666, %v751
          %v753 = vmul.f32 %v752, 1.442695
          %v754 = vpow.pop %v753
          %756 = vrot.lane.b32.xlu0 %v754, 88
          %v757 = vpop.permute.xlu0 %756
          %v759 = vsel %vm726, %v757, 0.0
          %760 = vadd.xlane.f32.xlu0 %v759
          %v761 = vpop.xlane.xlu0 %760
          %v762 = vrcp.pop %v761
          %v763 = vmul.f32 %v754, %v762
          %vm764 = vcmask 392544
          %v765 = vsel %vm764, %v666, -inf
          %766 = vmax.xlane.f32.xlu0 %v765
          %v767 = vpop.xlane.xlu0 %766
          %v768 = vsub.f32 %v666, %v767
          %v769 = vmul.f32 %v768, 1.442695
          %v770 = vpow.pop %v769
          %772 = vrot.lane.b32.xlu0 %v770, 84
          %v773 = vpop.permute.xlu0 %772
          %v775 = vsel %vm726, %v773, 0.0
          %776 = vadd.xlane.f32.xlu0 %v775
          %v777 = vpop.xlane.xlu0 %776
          %v778 = vrcp.pop %v777
          %v779 = vmul.f32 %v770, %v778
          %781 = vrot.lane.b32.xlu0 %v731, 96
          %v782 = vpop.permute.xlu0 %781
          %785 = vrot.lane.b32.xlu0 %v747, 94
          %v786 = vpop.permute.xlu0 %785
          %789 = vrot.lane.b32.xlu0 %v763, 92
          %v790 = vpop.permute.xlu0 %789
          %793 = vrot.lane.b32.xlu0 %v779, 90
          %v794 = vpop.permute.xlu0 %793
          %vm796 = vcmask 15360
          %v797 = vsel %vm796, %v782, %v786
          %v798 = vsel %vm726, %v797, %v790
          %vm799 = vcmask 48128
          %v800 = vsel %vm799, %v798, %v794
          %801 = vst.msk [vmem:[#allocation4] sm:$0xff] %vm683, %v800
          %802 = vrot.lane.b32.xlu0 %v731, 94
          %v803 = vpop.permute.xlu0 %802
          %805 = vrot.lane.b32.xlu0 %v747, 92
          %v806 = vpop.permute.xlu0 %805
          %808 = vrot.lane.b32.xlu0 %v763, 90
          %v809 = vpop.permute.xlu0 %808
          %811 = vrot.lane.b32.xlu0 %v779, 88
          %v812 = vpop.permute.xlu0 %811
          %v814 = vsel %vm796, %v803, %v806
          %v815 = vsel %vm726, %v814, %v809
          %v816 = vsel %vm799, %v815, %v812
          %s817 = scalar_lea.vmem [#allocation4], 8
          %818 = vst.msk [vmem:[%s817] sm:$0xff] %vm683, %v816
          %819 = vst.msk [vmem:[#allocation5] sm:$0xff] %vm652, 0.0
        $region76: #{tpu_custom_call.1} parent=71 // pred_fallthru
          _
        %s820 = sld [smem:[#allocation7 + %s43]]
        %v821 = vld [vmem:[#allocation2] sm:$0xff]
        %v822 = vld [vmem:[#allocation3] sm:$0xff]
        %v823 = vld [vmem:[#allocation4] sm:$0xff]
        %p824 = scmp.eq.s32.totalorder %s820, 1
        %s825 = scalar_lea.vmem [#allocation2], 8
        %v826 = vld [vmem:[%s825] sm:$0xff]
        %s827 = scalar_select %p824, 1, 0
        %v828 = vstv %s827
        %vm829 = vcmp.eq.s32.totalorder %v828, 1
        %v830 = vsel %vm829, %v826, %v821
        %s831 = scalar_lea.vmem [#allocation3], 8
        %v832 = vld [vmem:[%s831] sm:$0xff]
        %v833 = vsel %vm829, %v832, %v822
        %s834 = scalar_lea.vmem [#allocation4], 8
        %v835 = vld [vmem:[%s834] sm:$0xff]
        %v836 = vsel %vm829, %v835, %v823
        %v837 = vld [vmem:[%s621] sm:$0x1]
        %v838 = vld [vmem:[%s624] sm:$0x1]
        %v839 = vld [vmem:[%s618] sm:$0x1]
        %v840 = vld [vmem:[%s610] sm:$0xf]
        %v841 = vld [vmem:[%s610 + $0x4] sm:$0xf]
        %v842 = vld [vmem:[%s610 + $0x8] sm:$0xf]
        %v843 = vld [vmem:[%s610 + $0xc] sm:$0xf]
        %v844 = vld [vmem:[%s610 + $0x10] sm:$0xf]
        %v845 = vld [vmem:[%s610 + $0x14] sm:$0xf]
        %v846 = vld [vmem:[%s610 + $0x18] sm:$0xf]
        %v847 = vld [vmem:[%s610 + $0x1c] sm:$0xf]
        %v848 = vld [vmem:[%s610 + $0x20] sm:$0xf]
        %v849 = vld [vmem:[%s610 + $0x24] sm:$0xf]
        %v850 = vld [vmem:[%s610 + $0x28] sm:$0xf]
        %v851 = vld [vmem:[%s610 + $0x2c] sm:$0xf]
        %v852 = vld [vmem:[%s610 + $0x30] sm:$0xf]
        %v853 = vld [vmem:[%s610 + $0x34] sm:$0xf]
        %v854 = vld [vmem:[%s610 + $0x38] sm:$0xf]
        %v855 = vld [vmem:[%s610 + $0x3c] sm:$0xf]
        %v856 = vld [vmem:[%s8] sm:$0xf]
        %v857 = vld [vmem:[%s8 + $0x4] sm:$0xf]
        %v858 = vld [vmem:[%s8 + $0x8] sm:$0xf]
        %v859 = vld [vmem:[%s8 + $0xc] sm:$0xf]
        %v860 = vld [vmem:[%s9] sm:$0x1]
        %v862 = vperm.slane %v860, 0
        %v880 = vunpack.c.l.b16 %v840
        %v881 = vunpack.c.l.b16 %v841
        %v882 = vunpack.c.l.b16 %v842
        %v883 = vunpack.c.l.b16 %v843
        %v884 = vunpack.c.l.b16 %v844
        %v885 = vunpack.c.l.b16 %v845
        %v886 = vunpack.c.l.b16 %v846
        %v887 = vunpack.c.l.b16 %v847
        %v888 = vunpack.c.l.b16 %v848
        %v889 = vunpack.c.l.b16 %v849
        %v890 = vunpack.c.l.b16 %v850
        %v891 = vunpack.c.l.b16 %v851
        %v892 = vunpack.c.l.b16 %v852
        %v893 = vunpack.c.l.b16 %v853
        %v894 = vunpack.c.l.b16 %v854
        %v895 = vunpack.c.l.b16 %v855
        %v896 = vpack.c.b16 %v881, %v880
        %v897 = vpack.c.b16 %v883, %v882
        %v898 = vpack.c.b16 %v885, %v884
        %v899 = vpack.c.b16 %v887, %v886
        %v900 = vpack.c.b16 %v889, %v888
        %v901 = vpack.c.b16 %v891, %v890
        %v902 = vpack.c.b16 %v893, %v892
        %v903 = vpack.c.b16 %v895, %v894
        %v908 = vunpack.c.l.b16 %v856
        %v909 = vunpack.c.l.b16 %v857
        %v910 = vunpack.c.l.b16 %v858
        %v911 = vunpack.c.l.b16 %v859
        %v912 = vpack.c.b16 %v909, %v908
        %v913 = vpack.c.b16 %v911, %v910
        %vm916 = vcmask 261120
        %v918 = vsel %vm916, %v896, 0
        %v921 = vsel %vm916, %v897, 0
        %v924 = vsel %vm916, %v898, 0
        %v927 = vsel %vm916, %v899, 0
        %v930 = vsel %vm916, %v900, 0
        %v933 = vsel %vm916, %v901, 0
        %v936 = vsel %vm916, %v902, 0
        %v939 = vsel %vm916, %v903, 0
        %941 = vmatpush.bf16.msra.mxu0 0
        %942 = vmatpush.bf16.msra.mxu0 0
        %943 = vmatpush.bf16.msra.mxu0 0
        %944 = vmatpush.bf16.msra.mxu0 0
        %945 = vmatpush.bf16.msra.mxu0 0
        %946 = vmatpush.bf16.msra.mxu0 0
        %947 = vmatpush.bf16.msra.mxu0 %v913
        %948 = vmatpush.bf16.msra.mxu0 %v912
        %949 = vmatmul.bf16.gmra.mxu0 %v918
        %v950 = vpop.f32.mrf.mxu0
        %v951 = vadd.f32 %v862, %v950
        %v952 = vpop.f32.mrf.mxu0
        %v953 = vadd.f32 %v862, %v952
        %954 = vmatmul.bf16.gmra.mxu0 %v921
        %v955 = vpop.f32.mrf.mxu0
        %v956 = vadd.f32 %v862, %v955
        %v957 = vpop.f32.mrf.mxu0
        %v958 = vadd.f32 %v862, %v957
        %959 = vmatmul.bf16.gmra.mxu0 %v924
        %v960 = vpop.f32.mrf.mxu0
        %v961 = vadd.f32 %v862, %v960
        %v962 = vpop.f32.mrf.mxu0
        %v963 = vadd.f32 %v862, %v962
        %964 = vmatmul.bf16.gmra.mxu0 %v927
        %v965 = vpop.f32.mrf.mxu0
        %v966 = vadd.f32 %v862, %v965
        %v967 = vpop.f32.mrf.mxu0
        %v968 = vadd.f32 %v862, %v967
        %969 = vmatmul.bf16.gmra.mxu0 %v930
        %v970 = vpop.f32.mrf.mxu0
        %v971 = vadd.f32 %v862, %v970
        %v972 = vpop.f32.mrf.mxu0
        %v973 = vadd.f32 %v862, %v972
        %974 = vmatmul.bf16.gmra.mxu0 %v933
        %v975 = vpop.f32.mrf.mxu0
        %v976 = vadd.f32 %v862, %v975
        %v977 = vpop.f32.mrf.mxu0
        %v978 = vadd.f32 %v862, %v977
        %979 = vmatmul.bf16.gmra.mxu0 %v936
        %v980 = vpop.f32.mrf.mxu0
        %v981 = vadd.f32 %v862, %v980
        %v982 = vpop.f32.mrf.mxu0
        %v983 = vadd.f32 %v862, %v982
        %984 = vmatmul.bf16.gmra.mxu0 %v939
        %v985 = vpop.f32.mrf.mxu0
        %v986 = vadd.f32 %v862, %v985
        %v987 = vpop.f32.mrf.mxu0
        %v988 = vadd.f32 %v862, %v987
        %989 = vdwg.mxu0
        %v990 = vpack.c.bf16 %v951, %v951
        %v991 = vpack.c.bf16 %v953, %v953
        %v992 = vpack.c.bf16 %v956, %v956
        %v993 = vpack.c.bf16 %v958, %v958
        %v994 = vpack.c.bf16 %v961, %v961
        %v995 = vpack.c.bf16 %v963, %v963
        %v996 = vpack.c.bf16 %v966, %v966
        %v997 = vpack.c.bf16 %v968, %v968
        %v998 = vpack.c.bf16 %v971, %v971
        %v999 = vpack.c.bf16 %v973, %v973
        %v1000 = vpack.c.bf16 %v976, %v976
        %v1001 = vpack.c.bf16 %v978, %v978
        %v1002 = vpack.c.bf16 %v981, %v981
        %v1003 = vpack.c.bf16 %v983, %v983
        %v1004 = vpack.c.bf16 %v986, %v986
        %v1005 = vpack.c.bf16 %v988, %v988
        %1007 = vset.pattern.permute.xlu0 0
        %1008 = vperm.xlu0 %1007, %v830
        %v1009 = vpop.permute.xlu0 %1008
        %v1012 = vperm.slane %v837, 0
        %v1014 = vsub.f32 %v1009, %v1012
        %v1015 = vand.u32 2147483647, %v1014
        %v1016 = vsub.f32 1.0, %v1015
        %v1017 = vmax.f32 %v1016, 0.0
        %1019 = vset.pattern.permute.xlu0 0
        %1020 = vperm.xlu0 %1019, %v833
        %v1021 = vpop.permute.xlu0 %1020
        %v1024 = vperm.slane %v838, 0
        %v1026 = vsub.f32 %v1021, %v1024
        %v1027 = vand.u32 2147483647, %v1026
        %v1028 = vsub.f32 1.0, %v1027
        %v1029 = vmax.f32 %v1028, 0.0
        %v1030 = vmul.f32 %v1017, %v1029
        %1032 = vset.pattern.permute.xlu0 0
        %1033 = vperm.xlu0 %1032, %v836
        %v1034 = vpop.permute.xlu0 %1033
        %v1036 = vmul.f32 %v1030, %v1034
        %1037 = vset.pattern.permute.xlu0 1
        %1038 = vperm.xlu0 %1037, %v830
        %v1039 = vpop.permute.xlu0 %1038
        %v1041 = vsub.f32 %v1039, %v1012
        %v1042 = vand.u32 2147483647, %v1041
        %v1043 = vsub.f32 1.0, %v1042
        %v1044 = vmax.f32 %v1043, 0.0
        %1045 = vset.pattern.permute.xlu0 1
        %1046 = vperm.xlu0 %1045, %v833
        %v1047 = vpop.permute.xlu0 %1046
        %v1049 = vsub.f32 %v1047, %v1024
        %v1050 = vand.u32 2147483647, %v1049
        %v1051 = vsub.f32 1.0, %v1050
        %v1052 = vmax.f32 %v1051, 0.0
        %v1053 = vmul.f32 %v1044, %v1052
        %1054 = vset.pattern.permute.xlu0 1
        %1055 = vperm.xlu0 %1054, %v836
        %v1056 = vpop.permute.xlu0 %1055
        %v1058 = vmul.f32 %v1053, %v1056
        %v1059 = vadd.f32 %v1036, %v1058
        %v1061 = vperm.slane %v839, 0
        %v1063 = vmul.f32 %v1059, %v1061
        %v1064 = vld [vmem:[#allocation5] sm:$0xff]
        %v1065 = vpack.c.bf16 %v1063, %v1063
        %v1082 = vunpack.c.l.b16 %v990
        %v1083 = vunpack.c.l.b16 %v991
        %v1084 = vunpack.c.l.b16 %v992
        %v1085 = vunpack.c.l.b16 %v993
        %v1086 = vunpack.c.l.b16 %v994
        %v1087 = vunpack.c.l.b16 %v995
        %v1088 = vunpack.c.l.b16 %v996
        %v1089 = vunpack.c.l.b16 %v997
        %v1090 = vunpack.c.l.b16 %v998
        %v1091 = vunpack.c.l.b16 %v999
        %v1092 = vunpack.c.l.b16 %v1000
        %v1093 = vunpack.c.l.b16 %v1001
        %v1094 = vunpack.c.l.b16 %v1002
        %v1095 = vunpack.c.l.b16 %v1003
        %v1096 = vunpack.c.l.b16 %v1004
        %v1097 = vunpack.c.l.b16 %v1005
        %v1098 = vpack.c.b16 %v1083, %v1082
        %v1099 = vpack.c.b16 %v1085, %v1084
        %v1100 = vpack.c.b16 %v1087, %v1086
        %v1101 = vpack.c.b16 %v1089, %v1088
        %v1102 = vpack.c.b16 %v1091, %v1090
        %v1103 = vpack.c.b16 %v1093, %v1092
        %v1104 = vpack.c.b16 %v1095, %v1094
        %v1105 = vpack.c.b16 %v1097, %v1096
        %1114 = vmatpush.bf16.msra.mxu0 %v1105
        %1115 = vmatpush.bf16.msra.mxu0 %v1104
        %1116 = vmatpush.bf16.msra.mxu0 %v1103
        %1117 = vmatpush.bf16.msra.mxu0 %v1102
        %1118 = vmatpush.bf16.msra.mxu0 %v1101
        %1119 = vmatpush.bf16.msra.mxu0 %v1100
        %1120 = vmatpush.bf16.msra.mxu0 %v1099
        %1121 = vmatpush.bf16.msra.mxu0 %v1098
        %1122 = vmatmul.bf16.gmra.mxu0 %v1065
        %v1123 = vpop.f32.mrf.mxu0
        %v1124 = vadd.f32 0.0, %v1123
        %v1125 = vpop.f32.mrf.mxu0
        %1126 = vdwg.mxu0
        %v1127 = vadd.f32 %v1064, %v1124
        %vm1128 = vcmask 64512
        %1129 = vst.msk [vmem:[#allocation5] sm:$0xff] %vm1128, %v1127
        %1130 = vset.pattern.permute.xlu0 2
        %1131 = vperm.xlu0 %1130, %v830
        %v1132 = vpop.permute.xlu0 %1131
        %v1134 = vsub.f32 %v1132, %v1012
        %v1135 = vand.u32 2147483647, %v1134
        %v1136 = vsub.f32 1.0, %v1135
        %v1137 = vmax.f32 %v1136, 0.0
        %1138 = vset.pattern.permute.xlu0 2
        %1139 = vperm.xlu0 %1138, %v833
        %v1140 = vpop.permute.xlu0 %1139
        %v1142 = vsub.f32 %v1140, %v1024
        %v1143 = vand.u32 2147483647, %v1142
        %v1144 = vsub.f32 1.0, %v1143
        %v1145 = vmax.f32 %v1144, 0.0
        %v1146 = vmul.f32 %v1137, %v1145
        %1147 = vset.pattern.permute.xlu0 2
        %1148 = vperm.xlu0 %1147, %v836
        %v1149 = vpop.permute.xlu0 %1148
        %v1151 = vmul.f32 %v1146, %v1149
        %1152 = vset.pattern.permute.xlu0 3
        %1153 = vperm.xlu0 %1152, %v830
        %v1154 = vpop.permute.xlu0 %1153
        %v1156 = vsub.f32 %v1154, %v1012
        %v1157 = vand.u32 2147483647, %v1156
        %v1158 = vsub.f32 1.0, %v1157
        %v1159 = vmax.f32 %v1158, 0.0
        %1160 = vset.pattern.permute.xlu0 3
        %1161 = vperm.xlu0 %1160, %v833
        %v1162 = vpop.permute.xlu0 %1161
        %v1164 = vsub.f32 %v1162, %v1024
        %v1165 = vand.u32 2147483647, %v1164
        %v1166 = vsub.f32 1.0, %v1165
        %v1167 = vmax.f32 %v1166, 0.0
        %v1168 = vmul.f32 %v1159, %v1167
        %1169 = vset.pattern.permute.xlu0 3
        %1170 = vperm.xlu0 %1169, %v836
        %v1171 = vpop.permute.xlu0 %1170
        %v1173 = vmul.f32 %v1168, %v1171
        %v1174 = vadd.f32 %v1151, %v1173
        %v1175 = vmul.f32 %v1174, %v1061
        %v1176 = vld [vmem:[#allocation5] sm:$0xff]
        %v1177 = vpack.c.bf16 %v1175, %v1175
        %1178 = vrot.lane.b32.xlu0 %v1098, 120
        %v1179 = vpop.permute.xlu0 %1178
        %1180 = vrot.lane.b32.xlu0 %v1099, 120
        %v1181 = vpop.permute.xlu0 %1180
        %1182 = vrot.lane.b32.xlu0 %v1100, 120
        %v1183 = vpop.permute.xlu0 %1182
        %1184 = vrot.lane.b32.xlu0 %v1101, 120
        %v1185 = vpop.permute.xlu0 %1184
        %1186 = vrot.lane.b32.xlu0 %v1102, 120
        %v1187 = vpop.permute.xlu0 %1186
        %1188 = vrot.lane.b32.xlu0 %v1103, 120
        %v1189 = vpop.permute.xlu0 %1188
        %1190 = vrot.lane.b32.xlu0 %v1104, 120
        %v1191 = vpop.permute.xlu0 %1190
        %1192 = vrot.lane.b32.xlu0 %v1105, 120
        %v1193 = vpop.permute.xlu0 %1192
        %1202 = vmatpush.bf16.msra.mxu0 %v1193
        %1203 = vmatpush.bf16.msra.mxu0 %v1191
        %1204 = vmatpush.bf16.msra.mxu0 %v1189
        %1205 = vmatpush.bf16.msra.mxu0 %v1187
        %1206 = vmatpush.bf16.msra.mxu0 %v1185
        %1207 = vmatpush.bf16.msra.mxu0 %v1183
        %1208 = vmatpush.bf16.msra.mxu0 %v1181
        %1209 = vmatpush.bf16.msra.mxu0 %v1179
        %1210 = vmatmul.bf16.gmra.mxu0 %v1177
        %v1211 = vpop.f32.mrf.mxu0
        %v1212 = vadd.f32 0.0, %v1211
        %v1213 = vpop.f32.mrf.mxu0
        %1214 = vdwg.mxu0
        %1216 = vrot.lane.b32.xlu0 %v1212, 8
        %v1217 = vpop.permute.xlu0 %1216
        %v1219 = vadd.f32 %v1176, %v1217
        %vm1220 = vcmask 130112
        %1221 = vst.msk [vmem:[#allocation5] sm:$0xff] %vm1220, %v1219
        %1222 = vset.pattern.permute.xlu0 4
        %1223 = vperm.xlu0 %1222, %v830
        %v1224 = vpop.permute.xlu0 %1223
        %v1226 = vsub.f32 %v1224, %v1012
        %v1227 = vand.u32 2147483647, %v1226
        %v1228 = vsub.f32 1.0, %v1227
        %v1229 = vmax.f32 %v1228, 0.0
        %1230 = vset.pattern.permute.xlu0 4
        %1231 = vperm.xlu0 %1230, %v833
        %v1232 = vpop.permute.xlu0 %1231
        %v1234 = vsub.f32 %v1232, %v1024
        %v1235 = vand.u32 2147483647, %v1234
        %v1236 = vsub.f32 1.0, %v1235
        %v1237 = vmax.f32 %v1236, 0.0
        %v1238 = vmul.f32 %v1229, %v1237
        %1239 = vset.pattern.permute.xlu0 4
        %1240 = vperm.xlu0 %1239, %v836
        %v1241 = vpop.permute.xlu0 %1240
        %v1243 = vmul.f32 %v1238, %v1241
        %1244 = vset.pattern.permute.xlu0 5
        %1245 = vperm.xlu0 %1244, %v830
        %v1246 = vpop.permute.xlu0 %1245
        %v1248 = vsub.f32 %v1246, %v1012
        %v1249 = vand.u32 2147483647, %v1248
        %v1250 = vsub.f32 1.0, %v1249
        %v1251 = vmax.f32 %v1250, 0.0
        %1252 = vset.pattern.permute.xlu0 5
        %1253 = vperm.xlu0 %1252, %v833
        %v1254 = vpop.permute.xlu0 %1253
        %v1256 = vsub.f32 %v1254, %v1024
        %v1257 = vand.u32 2147483647, %v1256
        %v1258 = vsub.f32 1.0, %v1257
        %v1259 = vmax.f32 %v1258, 0.0
        %v1260 = vmul.f32 %v1251, %v1259
        %1261 = vset.pattern.permute.xlu0 5
        %1262 = vperm.xlu0 %1261, %v836
        %v1263 = vpop.permute.xlu0 %1262
        %v1265 = vmul.f32 %v1260, %v1263
        %v1266 = vadd.f32 %v1243, %v1265
        %v1267 = vmul.f32 %v1266, %v1061
        %v1268 = vld [vmem:[#allocation5] sm:$0xff]
        %v1269 = vpack.c.bf16 %v1267, %v1267
        %1270 = vrot.lane.b32.xlu0 %v1098, 112
        %v1271 = vpop.permute.xlu0 %1270
        %1272 = vrot.lane.b32.xlu0 %v1099, 112
        %v1273 = vpop.permute.xlu0 %1272
        %1274 = vrot.lane.b32.xlu0 %v1100, 112
        %v1275 = vpop.permute.xlu0 %1274
        %1276 = vrot.lane.b32.xlu0 %v1101, 112
        %v1277 = vpop.permute.xlu0 %1276
        %1278 = vrot.lane.b32.xlu0 %v1102, 112
        %v1279 = vpop.permute.xlu0 %1278
        %1280 = vrot.lane.b32.xlu0 %v1103, 112
        %v1281 = vpop.permute.xlu0 %1280
        %1282 = vrot.lane.b32.xlu0 %v1104, 112
        %v1283 = vpop.permute.xlu0 %1282
        %1284 = vrot.lane.b32.xlu0 %v1105, 112
        %v1285 = vpop.permute.xlu0 %1284
        %1294 = vmatpush.bf16.msra.mxu0 %v1285
        %1295 = vmatpush.bf16.msra.mxu0 %v1283
        %1296 = vmatpush.bf16.msra.mxu0 %v1281
        %1297 = vmatpush.bf16.msra.mxu0 %v1279
        %1298 = vmatpush.bf16.msra.mxu0 %v1277
        %1299 = vmatpush.bf16.msra.mxu0 %v1275
        %1300 = vmatpush.bf16.msra.mxu0 %v1273
        %1301 = vmatpush.bf16.msra.mxu0 %v1271
        %1302 = vmatmul.bf16.gmra.mxu0 %v1269
        %v1303 = vpop.f32.mrf.mxu0
        %v1304 = vadd.f32 0.0, %v1303
        %v1305 = vpop.f32.mrf.mxu0
        %1306 = vdwg.mxu0
        %1308 = vrot.lane.b32.xlu0 %v1304, 16
        %v1309 = vpop.permute.xlu0 %1308
        %v1311 = vadd.f32 %v1268, %v1309
        %vm1312 = vcmask 195712
        %1313 = vst.msk [vmem:[#allocation5] sm:$0xff] %vm1312, %v1311
        %1314 = vset.pattern.permute.xlu0 6
        %1315 = vperm.xlu0 %1314, %v830
        %v1316 = vpop.permute.xlu0 %1315
        %v1318 = vsub.f32 %v1316, %v1012
        %v1319 = vand.u32 2147483647, %v1318
        %v1320 = vsub.f32 1.0, %v1319
        %v1321 = vmax.f32 %v1320, 0.0
        %1322 = vset.pattern.permute.xlu0 6
        %1323 = vperm.xlu0 %1322, %v833
        %v1324 = vpop.permute.xlu0 %1323
        %v1326 = vsub.f32 %v1324, %v1024
        %v1327 = vand.u32 2147483647, %v1326
        %v1328 = vsub.f32 1.0, %v1327
        %v1329 = vmax.f32 %v1328, 0.0
        %v1330 = vmul.f32 %v1321, %v1329
        %1331 = vset.pattern.permute.xlu0 6
        %1332 = vperm.xlu0 %1331, %v836
        %v1333 = vpop.permute.xlu0 %1332
        %v1335 = vmul.f32 %v1330, %v1333
        %1336 = vset.pattern.permute.xlu0 7
        %1337 = vperm.xlu0 %1336, %v830
        %v1338 = vpop.permute.xlu0 %1337
        %v1340 = vsub.f32 %v1338, %v1012
        %v1341 = vand.u32 2147483647, %v1340
        %v1342 = vsub.f32 1.0, %v1341
        %v1343 = vmax.f32 %v1342, 0.0
        %1344 = vset.pattern.permute.xlu0 7
        %1345 = vperm.xlu0 %1344, %v833
        %v1346 = vpop.permute.xlu0 %1345
        %v1348 = vsub.f32 %v1346, %v1024
        %v1349 = vand.u32 2147483647, %v1348
        %v1350 = vsub.f32 1.0, %v1349
        %v1351 = vmax.f32 %v1350, 0.0
        %v1352 = vmul.f32 %v1343, %v1351
        %1353 = vset.pattern.permute.xlu0 7
        %1354 = vperm.xlu0 %1353, %v836
        %v1355 = vpop.permute.xlu0 %1354
        %v1357 = vmul.f32 %v1352, %v1355
        %v1358 = vadd.f32 %v1335, %v1357
        %v1359 = vmul.f32 %v1358, %v1061
        %v1360 = vld [vmem:[#allocation5] sm:$0xff]
        %v1361 = vpack.c.bf16 %v1359, %v1359
        %1362 = vrot.lane.b32.xlu0 %v1098, 104
        %v1363 = vpop.permute.xlu0 %1362
        %1364 = vrot.lane.b32.xlu0 %v1099, 104
        %v1365 = vpop.permute.xlu0 %1364
        %1366 = vrot.lane.b32.xlu0 %v1100, 104
        %v1367 = vpop.permute.xlu0 %1366
        %1368 = vrot.lane.b32.xlu0 %v1101, 104
        %v1369 = vpop.permute.xlu0 %1368
        %1370 = vrot.lane.b32.xlu0 %v1102, 104
        %v1371 = vpop.permute.xlu0 %1370
        %1372 = vrot.lane.b32.xlu0 %v1103, 104
        %v1373 = vpop.permute.xlu0 %1372
        %1374 = vrot.lane.b32.xlu0 %v1104, 104
        %v1375 = vpop.permute.xlu0 %1374
        %1376 = vrot.lane.b32.xlu0 %v1105, 104
        %v1377 = vpop.permute.xlu0 %1376
        %1386 = vmatpush.bf16.msra.mxu0 %v1377
        %1387 = vmatpush.bf16.msra.mxu0 %v1375
        %1388 = vmatpush.bf16.msra.mxu0 %v1373
        %1389 = vmatpush.bf16.msra.mxu0 %v1371
        %1390 = vmatpush.bf16.msra.mxu0 %v1369
        %1391 = vmatpush.bf16.msra.mxu0 %v1367
        %1392 = vmatpush.bf16.msra.mxu0 %v1365
        %1393 = vmatpush.bf16.msra.mxu0 %v1363
        %1394 = vmatmul.bf16.gmra.mxu0 %v1361
        %v1395 = vpop.f32.mrf.mxu0
        %v1396 = vadd.f32 0.0, %v1395
        %v1397 = vpop.f32.mrf.mxu0
        %1398 = vdwg.mxu0
        %1400 = vrot.lane.b32.xlu0 %v1396, 24
        %v1401 = vpop.permute.xlu0 %1400
        %v1403 = vadd.f32 %v1360, %v1401
        %vm1404 = vcmask 261312
        %1405 = vst.msk [vmem:[#allocation5] sm:$0xff] %vm1404, %v1403
        %p1406 = scmp.eq.s32.totalorder %s43, 1
        // Predicated region
        $region77: #{tpu_custom_call.1} parent=71 // pred_check
          %p1407 = pneg %p1406
        $region78: #{tpu_custom_call.1} parent=71 // pred_check_branch
          %1409 = sbr.rel (%p1407) target = $region80
        $region79: #{tpu_custom_call.1} parent=71 // pred_region
          %v1410 = vld [vmem:[#allocation5] sm:$0xff]
          %v1411 = vpack.c.bf16 %v1410, %v1410
          %v1412 = vld [vmem:[%s12] sm:$0xf]
          %v1413 = vld [vmem:[%s12 + $0x4] sm:$0xf]
          %v1414 = vld [vmem:[%s12 + $0x8] sm:$0xf]
          %v1415 = vld [vmem:[%s12 + $0xc] sm:$0xf]
          %v1416 = vld [vmem:[%s13] sm:$0x1]
          %v1418 = vperm.slane %v1416, 0
          %v1424 = vunpack.c.l.b16 %v1412
          %v1425 = vunpack.c.l.b16 %v1413
          %v1426 = vunpack.c.l.b16 %v1414
          %v1427 = vunpack.c.l.b16 %v1415
          %v1428 = vpack.c.b16 %v1425, %v1424
          %v1429 = vpack.c.b16 %v1427, %v1426
          %v1433 = vsel %vm916, %v1411, 0
          %1435 = vmatpush.bf16.msra.mxu0 0
          %1436 = vmatpush.bf16.msra.mxu0 0
          %1437 = vmatpush.bf16.msra.mxu0 0
          %1438 = vmatpush.bf16.msra.mxu0 0
          %1439 = vmatpush.bf16.msra.mxu0 0
          %1440 = vmatpush.bf16.msra.mxu0 0
          %1441 = vmatpush.bf16.msra.mxu0 %v1429
          %1442 = vmatpush.bf16.msra.mxu0 %v1428
          %1443 = vmatmul.bf16.gmra.mxu0 %v1433
          %v1444 = vpop.f32.mrf.mxu0
          %v1445 = vadd.f32 %v1418, %v1444
          %v1446 = vpop.f32.mrf.mxu0
          %1447 = vdwg.mxu0
          %v1448 = vld [vmem:[%s601] sm:$0xff]
          %v1449 = vadd.f32 %v1445, %v1448
          %1450 = vst.msk [vmem:[%s580] sm:$0xff] %vm916, %v1449
        $region80: #{tpu_custom_call.1} parent=71 // pred_fallthru
          _
        %s1451 = sand.u32 %s383, 1
        %s1452 = scalar_lea.sflag [#allocation9], %s1451
        %s1453 = sand.u32 %s383, 1
        %s1454 = smul.addr %s1453, 8
        %s1455 = scalar_lea.vmem [#allocation8], %s1454
        // Predicated region
        $region81: #{tpu_custom_call.1} parent=71 // pred_check
          %p1456 = pneg %p393
        $region82: #{tpu_custom_call.1} parent=71 // pred_check_branch
          %1458 = sbr.rel (%p1456) target = $region84
        $region83: #{tpu_custom_call.1} parent=71 // pred_region
          %1460 = vsyncadd %s1452, 0
          %s1461 = sadd.s32 %s42, %s41
          %s1462 = smul.addr %s1461, 8
          %s1463 = scalar_lea.hbm %s14, %s1462
          %s1465 = sshll.u32 %s1455, 4
          %s1466 = int_to_ptr.vmem [resolvable:$true] %s1465
          %s1467 = sshll.u32 %s1463, 4
          %s1468 = int_to_ptr.hbm [resolvable:$true] %s1467
          %1470 = dma.vmem_to_hbm [thread:$0]  %s1466, 128, %s1468, %s1452
        $region84: #{tpu_custom_call.1} parent=71 // pred_fallthru
          _
      $region72: #{tpu_custom_call.1} parent=5 // pred_fallthru
        _
      %p1471 = scmp.le.s32.totalorder 2, %s31
      // Predicated region
      $region85: #{tpu_custom_call.1} parent=5 // pred_check
        %p1472 = pneg %p1471
      $region86: #{tpu_custom_call.1} parent=5 // pred_check_branch
        %1474 = sbr.rel (%p1472) target = $region88
      $region87: #{tpu_custom_call.1} parent=5 // pred_region
        %s1475 = ssub.s32 %s31, 2
        // Predicated region
        $region89: #{tpu_custom_call.1} parent=87 // pred_check
          %p1476 = pneg %p399
        $region90: #{tpu_custom_call.1} parent=87 // pred_check_branch
          %1478 = sbr.rel (%p1476) target = $region92
        $region91: #{tpu_custom_call.1} parent=87 // pred_region
          %s1479 = sand.u32 %s384, 1
          %s1480 = scalar_lea.sflag [#allocation9], %s1479
          %s1481 = sand.u32 %s384, 1
          %s1482 = smul.addr %s1481, 8
          %s1483 = scalar_lea.vmem [#allocation8], %s1482
          %1485 = dma.done %s1480, 128
        $region92: #{tpu_custom_call.1} parent=87 // pred_fallthru
          _
      $region88: #{tpu_custom_call.1} parent=5 // pred_fallthru
        _
    $region6: #{tpu_custom_call.1} parent=1 // loop_footer
      %s35 = sadd.s32 1, %s31
    $region7: #{tpu_custom_call.1} parent=1 // loop_footer_branch
      %30 = sbr.rel target = $region3
    $region8: #{tpu_custom_call.1} parent=1 // loop_exit
      _
    %1486 = vsyncpa [#allocation9], 1
    %s1487 = scalar_lea.sflag [#allocation9], 1
    %1488 = vsyncpa %s1487, 1

</llo_original>
